<compile_context>
chip_gen: v6e
topology: v6e:2x2x1
jax: 0.10.0
libtpu: 0.0.40
codegen_flags: <defaults>
</compile_context>

<pallas_src>
import functools

import jax
import jax.numpy as jnp
from jax.experimental import pallas as pl
from jax.experimental.pallas import tpu as pltpu


def gru_fc_kernel(x_ref, wih_ref, whh_ref, bgi_ref, bhn_ref, wfc_ref, bfc_ref,
                  out_ref, gi_ref, *, T, Bp, Hp):
    """Single-layer GRU over time, then Linear(hidden, 1) on h_T.

    x_ref   : (T*Bp, I)    bf16  time-major flattened input (row = t*Bp + b)
    wih_ref : (I, 3*Hp)    bf16  fused input weights, gates (r,z,n) at lanes 0/Hp/2Hp
    whh_ref : (Hp, 3*Hp)   bf16  fused hidden weights, same gate layout
    bgi_ref : (1, 3*Hp)    f32   b_ih with b_hr / b_hz folded in (b_hn NOT folded)
    bhn_ref : (1, Hp)      f32   hidden bias of the candidate gate (inside r*(...))
    wfc_ref : (1, Hp)      f32   fc weight row (zero-padded past H)
    bfc_ref : (1, 1)       f32   fc bias
    out_ref : (Bp, 1)      f32   output (first B rows are valid)
    gi_ref  : (T*Bp, 3*Hp) f32   VMEM scratch for the hoisted input projections
    """
    # One big MXU call for every timestep's input projection + folded biases,
    # parked in VMEM scratch (not a live value) to keep vreg pressure low.
    gi_ref[...] = (jnp.dot(x_ref[...], wih_ref[...],
                           preferred_element_type=jnp.float32)
                   + bgi_ref[...])

    bhn = jnp.broadcast_to(bhn_ref[...], (Bp, Hp))   # 1 vreg, hoisted once

    h = jnp.zeros((Bp, Hp), dtype=jnp.float32)
    # Fully unrolled: T is small & static, so gi slices are static and the
    # scheduler can overlap EUP sigmoid/tanh with the next MXU push.
    for t in range(T):
        gi = gi_ref[pl.ds(t * Bp, Bp), :]                       # (Bp, 3Hp), free slice
        gh = jnp.dot(h.astype(jnp.bfloat16), whh_ref[...],
                     preferred_element_type=jnp.float32)        # (Bp, 3Hp)
        r = jax.nn.sigmoid(gi[:, 0:Hp] + gh[:, 0:Hp])
        z = jax.nn.sigmoid(gi[:, Hp:2 * Hp] + gh[:, Hp:2 * Hp])
        n = jnp.tanh(gi[:, 2 * Hp:3 * Hp] + r * (gh[:, 2 * Hp:3 * Hp] + bhn))
        h = n + z * (h - n)                                     # == (1-z)*n + z*h

    # fc: VPU multiply + lane reduction (padded lanes of h and wfc are 0).
    out_ref[...] = (jnp.sum(h * wfc_ref[...], axis=-1, keepdims=True)
                    + bfc_ref[...]).astype(out_ref.dtype)


@jax.jit
def gru_model_forward(x, wih, whh, bih, bhh, wfc, bfc):
    """x: (B, T, I) float32 -> (B, 1) float32.

    Weights in unpadded, h@W orientation:
      wih: (3, I, H), whh: (3, H, H), bih/bhh: (3, H)  (gate order r, z, n)
      wfc: (H, 1), bfc: (1, 1)
    """
    B, T, I = x.shape
    H = whh.shape[-1]
    Hp = max(128, ((H + 127) // 128) * 128)   # lane-pad each gate block
    Bp = max(8, ((B + 7) // 8) * 8)           # sublane-pad the batch

    def pad_last(w):  # (..., H) -> (..., Hp), zero fill
        return jnp.pad(w, [(0, 0)] * (w.ndim - 1) + [(0, Hp - H)])

    # Fused, gate-aligned weights: gate g lives in lanes [g*Hp, g*Hp + H).
    # MXU operands go bf16 (f32 accumulation requested in-kernel).
    wih_cat = jnp.concatenate([pad_last(wih[g]) for g in range(3)],
                              axis=-1).astype(jnp.bfloat16)                  # (I, 3Hp)
    whh_pad = jnp.pad(whh, ((0, 0), (0, Hp - H), (0, Hp - H)))               # (3, Hp, Hp)
    whh_cat = jnp.concatenate([whh_pad[g] for g in range(3)],
                              axis=-1).astype(jnp.bfloat16)                  # (Hp, 3Hp)

    # Fold b_hr / b_hz into the precomputed input-projection bias; keep b_hn
    # separate (it is scaled by r inside the candidate gate). Biases stay f32.
    bgi = jnp.concatenate([pad_last(bih[0] + bhh[0]),
                           pad_last(bih[1] + bhh[1]),
                           pad_last(bih[2])], axis=-1)[None, :]              # (1, 3Hp)
    bhn = pad_last(bhh[2])[None, :]                                          # (1, Hp)
    wfc_row = pad_last(wfc[:, 0])[None, :]                                   # (1, Hp)

    # Time-major flatten so timestep t occupies full sublane groups
    # [t*Bp, (t+1)*Bp) of the precomputed projection.
    x_t = jnp.transpose(x, (1, 0, 2))                    # (T, B, I)
    x_t = jnp.pad(x_t, ((0, 0), (0, Bp - B), (0, 0)))    # (T, Bp, I)
    x_tb = x_t.reshape(T * Bp, I).astype(jnp.bfloat16)

    vmem = pl.BlockSpec(memory_space=pltpu.MemorySpace.VMEM)
    kernel = functools.partial(gru_fc_kernel, T=T, Bp=Bp, Hp=Hp)
    out = pl.pallas_call(
        kernel,
        out_shape=jax.ShapeDtypeStruct((Bp, 1), jnp.float32),
        in_specs=[vmem] * 7,
        out_specs=vmem,
        scratch_shapes=[pltpu.VMEM((T * Bp, 3 * Hp), jnp.float32)],
    )(x_tb, wih_cat, whh_cat, bgi, bhn, wfc_row, bfc)
    return out[:B, :]


def init_params(key, input_size, hidden_size):
    """Deterministic init matching PyTorch shapes (uniform(-k, k), k=1/sqrt(H))."""
    k = 1.0 / jnp.sqrt(jnp.float32(hidden_size))
    ks = jax.random.split(key, 6)
    # Per-gate matrices kept pre-transposed (h @ W orientation): (3, I, H), (3, H, H).
    wih = jax.random.uniform(ks[0], (3, input_size, hidden_size),
                             jnp.float32, -k, k)
    whh = jax.random.uniform(ks[1], (3, hidden_size, hidden_size),
                             jnp.float32, -k, k)
    bih = jax.random.uniform(ks[2], (3, hidden_size), jnp.float32, -k, k)
    bhh = jax.random.uniform(ks[3], (3, hidden_size), jnp.float32, -k, k)
    kf = 1.0 / jnp.sqrt(jnp.float32(hidden_size))
    wfc = jax.random.uniform(ks[4], (hidden_size, 1), jnp.float32, -kf, kf)
    bfc = jax.random.uniform(ks[5], (1, 1), jnp.float32, -kf, kf)
    return wih, whh, bih, bhh, wfc, bfc


def reference_forward(x, wih, whh, bih, bhh, wfc, bfc, *, mxu_dtype=jnp.float32):
    """Pure-JAX reference of the same forward pass.

    mxu_dtype lets the reference mimic the kernel's bf16 matmul operands
    (accumulation stays f32) so the kernel can also be checked tightly.
    """
    B, T, _ = x.shape
    H = whh.shape[-1]

    def mm(a, b):
        return jnp.dot(a.astype(mxu_dtype), b.astype(mxu_dtype),
                       preferred_element_type=jnp.float32)

    h = jnp.zeros((B, H), jnp.float32)
    for t in range(T):
        x_t = x[:, t, :]
        r = jax.nn.sigmoid(mm(x_t, wih[0]) + bih[0] + mm(h, whh[0]) + bhh[0])
        z = jax.nn.sigmoid(mm(x_t, wih[1]) + bih[1] + mm(h, whh[1]) + bhh[1])
        n = jnp.tanh(mm(x_t, wih[2]) + bih[2] + r * (mm(h, whh[2]) + bhh[2]))
        h = (1.0 - z) * n + z * h
    return h @ wfc + bfc


if __name__ == "__main__":
    B, T, I, H = 2, 8, 4, 32  # batch, seq, input_size, hidden_size

    key = jax.random.PRNGKey(0)
    k_x, k_p = jax.random.split(key)
    x = jax.random.normal(k_x, (B, T, I), dtype=jnp.float32)
    params = init_params(k_p, I, H)

    out = gru_model_forward(x, *params)
    out = jax.block_until_ready(out)
    assert out.shape == (B, 1)

    # Tight check against a reference that uses the same bf16 MXU operands
    # (differences are only EUP-vs-XLA transcendental approximations).
    ref_bf16 = reference_forward(x, *params, mxu_dtype=jnp.bfloat16)
    assert jnp.allclose(out, ref_bf16, atol=5e-3, rtol=5e-3), (out, ref_bf16)

    # Loose check against the pure-f32 semantics of the original module
    # (difference is only bf16 rounding of the MXU operands).
    ref_f32 = reference_forward(x, *params, mxu_dtype=jnp.float32)
    assert jnp.allclose(out, ref_f32, atol=5e-2, rtol=5e-2), (out, ref_f32)

    print("KERNEL_OK")
</pallas_src>

<mosaic_0001>
module attributes {stable_mosaic.version = 11 : i64} {
  func.func @gru_fc_kernel(%arg0: memref<64x4xbf16, #tpu.memory_space<vmem>>, %arg1: memref<4x384xbf16, #tpu.memory_space<vmem>>, %arg2: memref<128x384xbf16, #tpu.memory_space<vmem>>, %arg3: memref<1x384xf32, #tpu.memory_space<vmem>>, %arg4: memref<1x128xf32, #tpu.memory_space<vmem>>, %arg5: memref<1x128xf32, #tpu.memory_space<vmem>>, %arg6: memref<1x1xf32, #tpu.memory_space<vmem>>, %arg7: memref<8x1xf32, #tpu.memory_space<vmem>>, %arg8: memref<64x384xf32, #tpu.memory_space<vmem>>) attributes {dimension_semantics = [], scalar_prefetch = 0 : i64, scratch_operands = 1 : i64, tpu.core_type = #tpu.core_type<tc>} {
    %c0 = arith.constant 0 : index
    %c0_0 = arith.constant 0 : index
    %0 = vector.load %arg0[%c0, %c0_0] : memref<64x4xbf16, #tpu.memory_space<vmem>>, vector<64x4xbf16>
    %c0_1 = arith.constant 0 : index
    %c0_2 = arith.constant 0 : index
    %1 = vector.load %arg1[%c0_1, %c0_2] : memref<4x384xbf16, #tpu.memory_space<vmem>>, vector<4x384xbf16>
    %cst = arith.constant dense<0.000000e+00> : vector<64x384xf32>
    %2 = tpu.matmul %0, %1, %cst {dimension_numbers = #tpu.dot_dimension_numbers<[1], [0], [0], [1], [0, 0, 1, 1], [], []>} : vector<64x4xbf16>, vector<4x384xbf16>, vector<64x384xf32> -> vector<64x384xf32>
    %c0_3 = arith.constant 0 : index
    %c0_4 = arith.constant 0 : index
    %3 = vector.load %arg3[%c0_3, %c0_4] : memref<1x384xf32, #tpu.memory_space<vmem>>, vector<1x384xf32>
    %4 = vector.broadcast %3 : vector<1x384xf32> to vector<64x384xf32>
    %5 = arith.addf %2, %4 : vector<64x384xf32>
    %c0_5 = arith.constant 0 : index
    %c0_6 = arith.constant 0 : index
    %6 = vector.load %arg8[%c0_5, %c0_6] : memref<64x384xf32, #tpu.memory_space<vmem>>, vector<64x384xf32>
    tpu.vector_store %arg8[%c0_5, %c0_6], %5 {strides = array<i32>} : memref<64x384xf32, #tpu.memory_space<vmem>>, vector<64x384xf32>,
    %c0_7 = arith.constant 0 : index
    %c0_8 = arith.constant 0 : index
    %7 = vector.load %arg4[%c0_7, %c0_8] : memref<1x128xf32, #tpu.memory_space<vmem>>, vector<1x128xf32>
    %8 = vector.shape_cast %7 : vector<1x128xf32> to vector<1x128xf32>
    %9 = vector.broadcast %8 : vector<1x128xf32> to vector<8x128xf32>
    %cst_9 = arith.constant 0.000000e+00 : f32
    %10 = vector.broadcast %cst_9 : f32 to vector<8x128xf32>
    %c0_10 = arith.constant 0 : index
    %c0_11 = arith.constant 0 : index
    %11 = vector.load %arg8[%c0_10, %c0_11] : memref<64x384xf32, #tpu.memory_space<vmem>>, vector<8x384xf32>
    %12 = arith.truncf %10 : vector<8x128xf32> to vector<8x128xbf16>
    %c0_12 = arith.constant 0 : index
    %c0_13 = arith.constant 0 : index
    %13 = vector.load %arg2[%c0_12, %c0_13] : memref<128x384xbf16, #tpu.memory_space<vmem>>, vector<128x384xbf16>
    %cst_14 = arith.constant dense<0.000000e+00> : vector<8x384xf32>
    %14 = tpu.matmul %12, %13, %cst_14 {dimension_numbers = #tpu.dot_dimension_numbers<[1], [0], [0], [1], [0, 0, 1, 1], [], []>} : vector<8x128xbf16>, vector<128x384xbf16>, vector<8x384xf32> -> vector<8x384xf32>
    %15 = vector.extract_strided_slice %11 {offsets = [0, 0], sizes = [8, 128], strides = [1, 1]} : vector<8x384xf32> to vector<8x128xf32>
    %16 = vector.extract_strided_slice %14 {offsets = [0, 0], sizes = [8, 128], strides = [1, 1]} : vector<8x384xf32> to vector<8x128xf32>
    %17 = arith.addf %15, %16 : vector<8x128xf32>
    %18 = arith.negf %17 : vector<8x128xf32>
    %19 = math.exp %18 : vector<8x128xf32>
    %cst_15 = arith.constant 1.000000e+00 : f32
    %20 = vector.broadcast %cst_15 : f32 to vector<8x128xf32>
    %21 = arith.addf %20, %19 : vector<8x128xf32>
    %22 = arith.divf %20, %21 : vector<8x128xf32>
    %23 = vector.extract_strided_slice %11 {offsets = [0, 128], sizes = [8, 128], strides = [1, 1]} : vector<8x384xf32> to vector<8x128xf32>
    %24 = vector.extract_strided_slice %14 {offsets = [0, 128], sizes = [8, 128], strides = [1, 1]} : vector<8x384xf32> to vector<8x128xf32>
    %25 = arith.addf %23, %24 : vector<8x128xf32>
    %26 = arith.negf %25 : vector<8x128xf32>
    %27 = math.exp %26 : vector<8x128xf32>
    %cst_16 = arith.constant 1.000000e+00 : f32
    %28 = vector.broadcast %cst_16 : f32 to vector<8x128xf32>
    %29 = arith.addf %28, %27 : vector<8x128xf32>
    %30 = arith.divf %28, %29 : vector<8x128xf32>
    %31 = vector.extract_strided_slice %11 {offsets = [0, 256], sizes = [8, 128], strides = [1, 1]} : vector<8x384xf32> to vector<8x128xf32>
    %32 = vector.extract_strided_slice %14 {offsets = [0, 256], sizes = [8, 128], strides = [1, 1]} : vector<8x384xf32> to vector<8x128xf32>
    %33 = arith.addf %32, %9 : vector<8x128xf32>
    %34 = arith.mulf %22, %33 : vector<8x128xf32>
    %35 = arith.addf %31, %34 : vector<8x128xf32>
    %36 = math.tanh %35 : vector<8x128xf32>
    %37 = arith.subf %10, %36 : vector<8x128xf32>
    %38 = arith.mulf %30, %37 : vector<8x128xf32>
    %39 = arith.addf %36, %38 : vector<8x128xf32>
    %c8 = arith.constant 8 : index
    %c0_17 = arith.constant 0 : index
    %40 = vector.load %arg8[%c8, %c0_17] : memref<64x384xf32, #tpu.memory_space<vmem>>, vector<8x384xf32>
    %41 = arith.truncf %39 : vector<8x128xf32> to vector<8x128xbf16>
    %c0_18 = arith.constant 0 : index
    %c0_19 = arith.constant 0 : index
    %42 = vector.load %arg2[%c0_18, %c0_19] : memref<128x384xbf16, #tpu.memory_space<vmem>>, vector<128x384xbf16>
    %cst_20 = arith.constant dense<0.000000e+00> : vector<8x384xf32>
    %43 = tpu.matmul %41, %42, %cst_20 {dimension_numbers = #tpu.dot_dimension_numbers<[1], [0], [0], [1], [0, 0, 1, 1], [], []>} : vector<8x128xbf16>, vector<128x384xbf16>, vector<8x384xf32> -> vector<8x384xf32>
    %44 = vector.extract_strided_slice %40 {offsets = [0, 0], sizes = [8, 128], strides = [1, 1]} : vector<8x384xf32> to vector<8x128xf32>
    %45 = vector.extract_strided_slice %43 {offsets = [0, 0], sizes = [8, 128], strides = [1, 1]} : vector<8x384xf32> to vector<8x128xf32>
    %46 = arith.addf %44, %45 : vector<8x128xf32>
    %47 = arith.negf %46 : vector<8x128xf32>
    %48 = math.exp %47 : vector<8x128xf32>
    %cst_21 = arith.constant 1.000000e+00 : f32
    %49 = vector.broadcast %cst_21 : f32 to vector<8x128xf32>
    %50 = arith.addf %49, %48 : vector<8x128xf32>
    %51 = arith.divf %49, %50 : vector<8x128xf32>
    %52 = vector.extract_strided_slice %40 {offsets = [0, 128], sizes = [8, 128], strides = [1, 1]} : vector<8x384xf32> to vector<8x128xf32>
    %53 = vector.extract_strided_slice %43 {offsets = [0, 128], sizes = [8, 128], strides = [1, 1]} : vector<8x384xf32> to vector<8x128xf32>
    %54 = arith.addf %52, %53 : vector<8x128xf32>
    %55 = arith.negf %54 : vector<8x128xf32>
    %56 = math.exp %55 : vector<8x128xf32>
    %cst_22 = arith.constant 1.000000e+00 : f32
    %57 = vector.broadcast %cst_22 : f32 to vector<8x128xf32>
    %58 = arith.addf %57, %56 : vector<8x128xf32>
    %59 = arith.divf %57, %58 : vector<8x128xf32>
    %60 = vector.extract_strided_slice %40 {offsets = [0, 256], sizes = [8, 128], strides = [1, 1]} : vector<8x384xf32> to vector<8x128xf32>
    %61 = vector.extract_strided_slice %43 {offsets = [0, 256], sizes = [8, 128], strides = [1, 1]} : vector<8x384xf32> to vector<8x128xf32>
    %62 = arith.addf %61, %9 : vector<8x128xf32>
    %63 = arith.mulf %51, %62 : vector<8x128xf32>
    %64 = arith.addf %60, %63 : vector<8x128xf32>
    %65 = math.tanh %64 : vector<8x128xf32>
    %66 = arith.subf %39, %65 : vector<8x128xf32>
    %67 = arith.mulf %59, %66 : vector<8x128xf32>
    %68 = arith.addf %65, %67 : vector<8x128xf32>
    %c16 = arith.constant 16 : index
    %c0_23 = arith.constant 0 : index
    %69 = vector.load %arg8[%c16, %c0_23] : memref<64x384xf32, #tpu.memory_space<vmem>>, vector<8x384xf32>
    %70 = arith.truncf %68 : vector<8x128xf32> to vector<8x128xbf16>
    %c0_24 = arith.constant 0 : index
    %c0_25 = arith.constant 0 : index
    %71 = vector.load %arg2[%c0_24, %c0_25] : memref<128x384xbf16, #tpu.memory_space<vmem>>, vector<128x384xbf16>
    %cst_26 = arith.constant dense<0.000000e+00> : vector<8x384xf32>
    %72 = tpu.matmul %70, %71, %cst_26 {dimension_numbers = #tpu.dot_dimension_numbers<[1], [0], [0], [1], [0, 0, 1, 1], [], []>} : vector<8x128xbf16>, vector<128x384xbf16>, vector<8x384xf32> -> vector<8x384xf32>
    %73 = vector.extract_strided_slice %69 {offsets = [0, 0], sizes = [8, 128], strides = [1, 1]} : vector<8x384xf32> to vector<8x128xf32>
    %74 = vector.extract_strided_slice %72 {offsets = [0, 0], sizes = [8, 128], strides = [1, 1]} : vector<8x384xf32> to vector<8x128xf32>
    %75 = arith.addf %73, %74 : vector<8x128xf32>
    %76 = arith.negf %75 : vector<8x128xf32>
    %77 = math.exp %76 : vector<8x128xf32>
    %cst_27 = arith.constant 1.000000e+00 : f32
    %78 = vector.broadcast %cst_27 : f32 to vector<8x128xf32>
    %79 = arith.addf %78, %77 : vector<8x128xf32>
    %80 = arith.divf %78, %79 : vector<8x128xf32>
    %81 = vector.extract_strided_slice %69 {offsets = [0, 128], sizes = [8, 128], strides = [1, 1]} : vector<8x384xf32> to vector<8x128xf32>
    %82 = vector.extract_strided_slice %72 {offsets = [0, 128], sizes = [8, 128], strides = [1, 1]} : vector<8x384xf32> to vector<8x128xf32>
    %83 = arith.addf %81, %82 : vector<8x128xf32>
    %84 = arith.negf %83 : vector<8x128xf32>
    %85 = math.exp %84 : vector<8x128xf32>
    %cst_28 = arith.constant 1.000000e+00 : f32
    %86 = vector.broadcast %cst_28 : f32 to vector<8x128xf32>
    %87 = arith.addf %86, %85 : vector<8x128xf32>
    %88 = arith.divf %86, %87 : vector<8x128xf32>
    %89 = vector.extract_strided_slice %69 {offsets = [0, 256], sizes = [8, 128], strides = [1, 1]} : vector<8x384xf32> to vector<8x128xf32>
    %90 = vector.extract_strided_slice %72 {offsets = [0, 256], sizes = [8, 128], strides = [1, 1]} : vector<8x384xf32> to vector<8x128xf32>
    %91 = arith.addf %90, %9 : vector<8x128xf32>
    %92 = arith.mulf %80, %91 : vector<8x128xf32>
    %93 = arith.addf %89, %92 : vector<8x128xf32>
    %94 = math.tanh %93 : vector<8x128xf32>
    %95 = arith.subf %68, %94 : vector<8x128xf32>
    %96 = arith.mulf %88, %95 : vector<8x128xf32>
    %97 = arith.addf %94, %96 : vector<8x128xf32>
    %c24 = arith.constant 24 : index
    %c0_29 = arith.constant 0 : index
    %98 = vector.load %arg8[%c24, %c0_29] : memref<64x384xf32, #tpu.memory_space<vmem>>, vector<8x384xf32>
    %99 = arith.truncf %97 : vector<8x128xf32> to vector<8x128xbf16>
    %c0_30 = arith.constant 0 : index
    %c0_31 = arith.constant 0 : index
    %100 = vector.load %arg2[%c0_30, %c0_31] : memref<128x384xbf16, #tpu.memory_space<vmem>>, vector<128x384xbf16>
    %cst_32 = arith.constant dense<0.000000e+00> : vector<8x384xf32>
    %101 = tpu.matmul %99, %100, %cst_32 {dimension_numbers = #tpu.dot_dimension_numbers<[1], [0], [0], [1], [0, 0, 1, 1], [], []>} : vector<8x128xbf16>, vector<128x384xbf16>, vector<8x384xf32> -> vector<8x384xf32>
    %102 = vector.extract_strided_slice %98 {offsets = [0, 0], sizes = [8, 128], strides = [1, 1]} : vector<8x384xf32> to vector<8x128xf32>
    %103 = vector.extract_strided_slice %101 {offsets = [0, 0], sizes = [8, 128], strides = [1, 1]} : vector<8x384xf32> to vector<8x128xf32>
    %104 = arith.addf %102, %103 : vector<8x128xf32>
    %105 = arith.negf %104 : vector<8x128xf32>
    %106 = math.exp %105 : vector<8x128xf32>
    %cst_33 = arith.constant 1.000000e+00 : f32
    %107 = vector.broadcast %cst_33 : f32 to vector<8x128xf32>
    %108 = arith.addf %107, %106 : vector<8x128xf32>
    %109 = arith.divf %107, %108 : vector<8x128xf32>
    %110 = vector.extract_strided_slice %98 {offsets = [0, 128], sizes = [8, 128], strides = [1, 1]} : vector<8x384xf32> to vector<8x128xf32>
    %111 = vector.extract_strided_slice %101 {offsets = [0, 128], sizes = [8, 128], strides = [1, 1]} : vector<8x384xf32> to vector<8x128xf32>
    %112 = arith.addf %110, %111 : vector<8x128xf32>
    %113 = arith.negf %112 : vector<8x128xf32>
    %114 = math.exp %113 : vector<8x128xf32>
    %cst_34 = arith.constant 1.000000e+00 : f32
    %115 = vector.broadcast %cst_34 : f32 to vector<8x128xf32>
    %116 = arith.addf %115, %114 : vector<8x128xf32>
    %117 = arith.divf %115, %116 : vector<8x128xf32>
    %118 = vector.extract_strided_slice %98 {offsets = [0, 256], sizes = [8, 128], strides = [1, 1]} : vector<8x384xf32> to vector<8x128xf32>
    %119 = vector.extract_strided_slice %101 {offsets = [0, 256], sizes = [8, 128], strides = [1, 1]} : vector<8x384xf32> to vector<8x128xf32>
    %120 = arith.addf %119, %9 : vector<8x128xf32>
    %121 = arith.mulf %109, %120 : vector<8x128xf32>
    %122 = arith.addf %118, %121 : vector<8x128xf32>
    %123 = math.tanh %122 : vector<8x128xf32>
    %124 = arith.subf %97, %123 : vector<8x128xf32>
    %125 = arith.mulf %117, %124 : vector<8x128xf32>
    %126 = arith.addf %123, %125 : vector<8x128xf32>
    %c32 = arith.constant 32 : index
    %c0_35 = arith.constant 0 : index
    %127 = vector.load %arg8[%c32, %c0_35] : memref<64x384xf32, #tpu.memory_space<vmem>>, vector<8x384xf32>
    %128 = arith.truncf %126 : vector<8x128xf32> to vector<8x128xbf16>
    %c0_36 = arith.constant 0 : index
    %c0_37 = arith.constant 0 : index
    %129 = vector.load %arg2[%c0_36, %c0_37] : memref<128x384xbf16, #tpu.memory_space<vmem>>, vector<128x384xbf16>
    %cst_38 = arith.constant dense<0.000000e+00> : vector<8x384xf32>
    %130 = tpu.matmul %128, %129, %cst_38 {dimension_numbers = #tpu.dot_dimension_numbers<[1], [0], [0], [1], [0, 0, 1, 1], [], []>} : vector<8x128xbf16>, vector<128x384xbf16>, vector<8x384xf32> -> vector<8x384xf32>
    %131 = vector.extract_strided_slice %127 {offsets = [0, 0], sizes = [8, 128], strides = [1, 1]} : vector<8x384xf32> to vector<8x128xf32>
    %132 = vector.extract_strided_slice %130 {offsets = [0, 0], sizes = [8, 128], strides = [1, 1]} : vector<8x384xf32> to vector<8x128xf32>
    %133 = arith.addf %131, %132 : vector<8x128xf32>
    %134 = arith.negf %133 : vector<8x128xf32>
    %135 = math.exp %134 : vector<8x128xf32>
    %cst_39 = arith.constant 1.000000e+00 : f32
    %136 = vector.broadcast %cst_39 : f32 to vector<8x128xf32>
    %137 = arith.addf %136, %135 : vector<8x128xf32>
    %138 = arith.divf %136, %137 : vector<8x128xf32>
    %139 = vector.extract_strided_slice %127 {offsets = [0, 128], sizes = [8, 128], strides = [1, 1]} : vector<8x384xf32> to vector<8x128xf32>
    %140 = vector.extract_strided_slice %130 {offsets = [0, 128], sizes = [8, 128], strides = [1, 1]} : vector<8x384xf32> to vector<8x128xf32>
    %141 = arith.addf %139, %140 : vector<8x128xf32>
    %142 = arith.negf %141 : vector<8x128xf32>
    %143 = math.exp %142 : vector<8x128xf32>
    %cst_40 = arith.constant 1.000000e+00 : f32
    %144 = vector.broadcast %cst_40 : f32 to vector<8x128xf32>
    %145 = arith.addf %144, %143 : vector<8x128xf32>
    %146 = arith.divf %144, %145 : vector<8x128xf32>
    %147 = vector.extract_strided_slice %127 {offsets = [0, 256], sizes = [8, 128], strides = [1, 1]} : vector<8x384xf32> to vector<8x128xf32>
    %148 = vector.extract_strided_slice %130 {offsets = [0, 256], sizes = [8, 128], strides = [1, 1]} : vector<8x384xf32> to vector<8x128xf32>
    %149 = arith.addf %148, %9 : vector<8x128xf32>
    %150 = arith.mulf %138, %149 : vector<8x128xf32>
    %151 = arith.addf %147, %150 : vector<8x128xf32>
    %152 = math.tanh %151 : vector<8x128xf32>
    %153 = arith.subf %126, %152 : vector<8x128xf32>
    %154 = arith.mulf %146, %153 : vector<8x128xf32>
    %155 = arith.addf %152, %154 : vector<8x128xf32>
    %c40 = arith.constant 40 : index
    %c0_41 = arith.constant 0 : index
    %156 = vector.load %arg8[%c40, %c0_41] : memref<64x384xf32, #tpu.memory_space<vmem>>, vector<8x384xf32>
    %157 = arith.truncf %155 : vector<8x128xf32> to vector<8x128xbf16>
    %c0_42 = arith.constant 0 : index
    %c0_43 = arith.constant 0 : index
    %158 = vector.load %arg2[%c0_42, %c0_43] : memref<128x384xbf16, #tpu.memory_space<vmem>>, vector<128x384xbf16>
    %cst_44 = arith.constant dense<0.000000e+00> : vector<8x384xf32>
    %159 = tpu.matmul %157, %158, %cst_44 {dimension_numbers = #tpu.dot_dimension_numbers<[1], [0], [0], [1], [0, 0, 1, 1], [], []>} : vector<8x128xbf16>, vector<128x384xbf16>, vector<8x384xf32> -> vector<8x384xf32>
    %160 = vector.extract_strided_slice %156 {offsets = [0, 0], sizes = [8, 128], strides = [1, 1]} : vector<8x384xf32> to vector<8x128xf32>
    %161 = vector.extract_strided_slice %159 {offsets = [0, 0], sizes = [8, 128], strides = [1, 1]} : vector<8x384xf32> to vector<8x128xf32>
    %162 = arith.addf %160, %161 : vector<8x128xf32>
    %163 = arith.negf %162 : vector<8x128xf32>
    %164 = math.exp %163 : vector<8x128xf32>
    %cst_45 = arith.constant 1.000000e+00 : f32
    %165 = vector.broadcast %cst_45 : f32 to vector<8x128xf32>
    %166 = arith.addf %165, %164 : vector<8x128xf32>
    %167 = arith.divf %165, %166 : vector<8x128xf32>
    %168 = vector.extract_strided_slice %156 {offsets = [0, 128], sizes = [8, 128], strides = [1, 1]} : vector<8x384xf32> to vector<8x128xf32>
    %169 = vector.extract_strided_slice %159 {offsets = [0, 128], sizes = [8, 128], strides = [1, 1]} : vector<8x384xf32> to vector<8x128xf32>
    %170 = arith.addf %168, %169 : vector<8x128xf32>
    %171 = arith.negf %170 : vector<8x128xf32>
    %172 = math.exp %171 : vector<8x128xf32>
    %cst_46 = arith.constant 1.000000e+00 : f32
    %173 = vector.broadcast %cst_46 : f32 to vector<8x128xf32>
    %174 = arith.addf %173, %172 : vector<8x128xf32>
    %175 = arith.divf %173, %174 : vector<8x128xf32>
    %176 = vector.extract_strided_slice %156 {offsets = [0, 256], sizes = [8, 128], strides = [1, 1]} : vector<8x384xf32> to vector<8x128xf32>
    %177 = vector.extract_strided_slice %159 {offsets = [0, 256], sizes = [8, 128], strides = [1, 1]} : vector<8x384xf32> to vector<8x128xf32>
    %178 = arith.addf %177, %9 : vector<8x128xf32>
    %179 = arith.mulf %167, %178 : vector<8x128xf32>
    %180 = arith.addf %176, %179 : vector<8x128xf32>
    %181 = math.tanh %180 : vector<8x128xf32>
    %182 = arith.subf %155, %181 : vector<8x128xf32>
    %183 = arith.mulf %175, %182 : vector<8x128xf32>
    %184 = arith.addf %181, %183 : vector<8x128xf32>
    %c48 = arith.constant 48 : index
    %c0_47 = arith.constant 0 : index
    %185 = vector.load %arg8[%c48, %c0_47] : memref<64x384xf32, #tpu.memory_space<vmem>>, vector<8x384xf32>
    %186 = arith.truncf %184 : vector<8x128xf32> to vector<8x128xbf16>
    %c0_48 = arith.constant 0 : index
    %c0_49 = arith.constant 0 : index
    %187 = vector.load %arg2[%c0_48, %c0_49] : memref<128x384xbf16, #tpu.memory_space<vmem>>, vector<128x384xbf16>
    %cst_50 = arith.constant dense<0.000000e+00> : vector<8x384xf32>
    %188 = tpu.matmul %186, %187, %cst_50 {dimension_numbers = #tpu.dot_dimension_numbers<[1], [0], [0], [1], [0, 0, 1, 1], [], []>} : vector<8x128xbf16>, vector<128x384xbf16>, vector<8x384xf32> -> vector<8x384xf32>
    %189 = vector.extract_strided_slice %185 {offsets = [0, 0], sizes = [8, 128], strides = [1, 1]} : vector<8x384xf32> to vector<8x128xf32>
    %190 = vector.extract_strided_slice %188 {offsets = [0, 0], sizes = [8, 128], strides = [1, 1]} : vector<8x384xf32> to vector<8x128xf32>
    %191 = arith.addf %189, %190 : vector<8x128xf32>
    %192 = arith.negf %191 : vector<8x128xf32>
    %193 = math.exp %192 : vector<8x128xf32>
    %cst_51 = arith.constant 1.000000e+00 : f32
    %194 = vector.broadcast %cst_51 : f32 to vector<8x128xf32>
    %195 = arith.addf %194, %193 : vector<8x128xf32>
    %196 = arith.divf %194, %195 : vector<8x128xf32>
    %197 = vector.extract_strided_slice %185 {offsets = [0, 128], sizes = [8, 128], strides = [1, 1]} : vector<8x384xf32> to vector<8x128xf32>
    %198 = vector.extract_strided_slice %188 {offsets = [0, 128], sizes = [8, 128], strides = [1, 1]} : vector<8x384xf32> to vector<8x128xf32>
    %199 = arith.addf %197, %198 : vector<8x128xf32>
    %200 = arith.negf %199 : vector<8x128xf32>
    %201 = math.exp %200 : vector<8x128xf32>
    %cst_52 = arith.constant 1.000000e+00 : f32
    %202 = vector.broadcast %cst_52 : f32 to vector<8x128xf32>
    %203 = arith.addf %202, %201 : vector<8x128xf32>
    %204 = arith.divf %202, %203 : vector<8x128xf32>
    %205 = vector.extract_strided_slice %185 {offsets = [0, 256], sizes = [8, 128], strides = [1, 1]} : vector<8x384xf32> to vector<8x128xf32>
    %206 = vector.extract_strided_slice %188 {offsets = [0, 256], sizes = [8, 128], strides = [1, 1]} : vector<8x384xf32> to vector<8x128xf32>
    %207 = arith.addf %206, %9 : vector<8x128xf32>
    %208 = arith.mulf %196, %207 : vector<8x128xf32>
    %209 = arith.addf %205, %208 : vector<8x128xf32>
    %210 = math.tanh %209 : vector<8x128xf32>
    %211 = arith.subf %184, %210 : vector<8x128xf32>
    %212 = arith.mulf %204, %211 : vector<8x128xf32>
    %213 = arith.addf %210, %212 : vector<8x128xf32>
    %c56 = arith.constant 56 : index
    %c0_53 = arith.constant 0 : index
    %214 = vector.load %arg8[%c56, %c0_53] : memref<64x384xf32, #tpu.memory_space<vmem>>, vector<8x384xf32>
    %215 = arith.truncf %213 : vector<8x128xf32> to vector<8x128xbf16>
    %c0_54 = arith.constant 0 : index
    %c0_55 = arith.constant 0 : index
    %216 = vector.load %arg2[%c0_54, %c0_55] : memref<128x384xbf16, #tpu.memory_space<vmem>>, vector<128x384xbf16>
    %cst_56 = arith.constant dense<0.000000e+00> : vector<8x384xf32>
    %217 = tpu.matmul %215, %216, %cst_56 {dimension_numbers = #tpu.dot_dimension_numbers<[1], [0], [0], [1], [0, 0, 1, 1], [], []>} : vector<8x128xbf16>, vector<128x384xbf16>, vector<8x384xf32> -> vector<8x384xf32>
    %218 = vector.extract_strided_slice %214 {offsets = [0, 0], sizes = [8, 128], strides = [1, 1]} : vector<8x384xf32> to vector<8x128xf32>
    %219 = vector.extract_strided_slice %217 {offsets = [0, 0], sizes = [8, 128], strides = [1, 1]} : vector<8x384xf32> to vector<8x128xf32>
    %220 = arith.addf %218, %219 : vector<8x128xf32>
    %221 = arith.negf %220 : vector<8x128xf32>
    %222 = math.exp %221 : vector<8x128xf32>
    %cst_57 = arith.constant 1.000000e+00 : f32
    %223 = vector.broadcast %cst_57 : f32 to vector<8x128xf32>
    %224 = arith.addf %223, %222 : vector<8x128xf32>
    %225 = arith.divf %223, %224 : vector<8x128xf32>
    %226 = vector.extract_strided_slice %214 {offsets = [0, 128], sizes = [8, 128], strides = [1, 1]} : vector<8x384xf32> to vector<8x128xf32>
    %227 = vector.extract_strided_slice %217 {offsets = [0, 128], sizes = [8, 128], strides = [1, 1]} : vector<8x384xf32> to vector<8x128xf32>
    %228 = arith.addf %226, %227 : vector<8x128xf32>
    %229 = arith.negf %228 : vector<8x128xf32>
    %230 = math.exp %229 : vector<8x128xf32>
    %cst_58 = arith.constant 1.000000e+00 : f32
    %231 = vector.broadcast %cst_58 : f32 to vector<8x128xf32>
    %232 = arith.addf %231, %230 : vector<8x128xf32>
    %233 = arith.divf %231, %232 : vector<8x128xf32>
    %234 = vector.extract_strided_slice %214 {offsets = [0, 256], sizes = [8, 128], strides = [1, 1]} : vector<8x384xf32> to vector<8x128xf32>
    %235 = vector.extract_strided_slice %217 {offsets = [0, 256], sizes = [8, 128], strides = [1, 1]} : vector<8x384xf32> to vector<8x128xf32>
    %236 = arith.addf %235, %9 : vector<8x128xf32>
    %237 = arith.mulf %225, %236 : vector<8x128xf32>
    %238 = arith.addf %234, %237 : vector<8x128xf32>
    %239 = math.tanh %238 : vector<8x128xf32>
    %240 = arith.subf %213, %239 : vector<8x128xf32>
    %241 = arith.mulf %233, %240 : vector<8x128xf32>
    %242 = arith.addf %239, %241 : vector<8x128xf32>
    %c0_59 = arith.constant 0 : index
    %c0_60 = arith.constant 0 : index
    %243 = vector.load %arg5[%c0_59, %c0_60] : memref<1x128xf32, #tpu.memory_space<vmem>>, vector<1x128xf32>
    %244 = vector.broadcast %243 : vector<1x128xf32> to vector<8x128xf32>
    %245 = arith.mulf %242, %244 : vector<8x128xf32>
    %cst_61 = arith.constant dense<0.000000e+00> : vector<8xf32>
    %246 = vector.multi_reduction <add>, %245, %cst_61 [1] : vector<8x128xf32> to vector<8xf32>
    %247 = vector.shape_cast %246 : vector<8xf32> to vector<8x1xf32>
    %c0_62 = arith.constant 0 : index
    %c0_63 = arith.constant 0 : index
    %248 = vector.load %arg6[%c0_62, %c0_63] : memref<1x1xf32, #tpu.memory_space<vmem>>, vector<1x1xf32>
    %249 = vector.broadcast %248 : vector<1x1xf32> to vector<8x1xf32>
    %250 = arith.addf %247, %249 : vector<8x1xf32>
    %c0_64 = arith.constant 0 : index
    %c0_65 = arith.constant 0 : index
    %251 = vector.load %arg7[%c0_64, %c0_65] : memref<8x1xf32, #tpu.memory_space<vmem>>, vector<8x1xf32>
    tpu.vector_store %arg7[%c0_64, %c0_65], %250 {strides = array<i32>} : memref<8x1xf32, #tpu.memory_space<vmem>>, vector<8x1xf32>,
    return
  }
}

</mosaic_0001>

<llo_original>
// kernel: gru_model_forward.1
$region0: #{gru_model_forward.1}
  #allocation0 [shape = 'u32[]', space=smem, size = 0x4, offset = 0x4, fixed_abs, tag = 'smem constant byte address 0x4 - core index']
  #allocation1 [shape = 'u32[144,128]{1,0:T(1,128)}', space=vmem, size = 0x12000, scoped, tag = 'internal scratch']
  #allocation2 [shape = 'f32[64,384]{1,0:T(8,128)}', space=vmem, size = 0x18000, scoped, tag = 'scratch operand']
  #allocation3 [shape = 'f32[1,1]{1,0:T(1,128)S(1)}', space=vmem, size = 0x200, scoped, tag = 'scoped memory for gru_model_forward.1']
  %s0 = inlined_call_operand.vmem [shape: bf16[64,4], index: 0, kind: input, shape index: {}]
  %s1 = inlined_call_operand.vmem [shape: bf16[4,384], index: 1, kind: input, shape index: {}]
  %s2 = inlined_call_operand.vmem [shape: bf16[128,384], index: 2, kind: input, shape index: {}]
  %s3 = inlined_call_operand.vmem [shape: f32[1,384], index: 3, kind: input, shape index: {}]
  %s4 = inlined_call_operand.vmem [shape: f32[1,128], index: 4, kind: input, shape index: {}]
  %s5 = inlined_call_operand.vmem [shape: f32[1,128], index: 5, kind: input, shape index: {}]
  %s6 = inlined_call_operand.<no memory space> [shape: f32[1,1], index: 6, kind: input, shape index: {}]
  %s7 = inlined_call_operand.vmem [shape: f32[8,1], index: 7, kind: output, shape index: {}]
  %s8 = sld [smem:[#allocation0]]
  $region38: #{gru_model_forward.1} parent=0
    _
  %s10 = ssub.s32 1, %s8
  %s11 = scalar_select 0, %s10, %s8
  %v12 = vstv %s6
  %13 = vst [vmem:[#allocation3] sm:$0x1] %v12
  // Predicated region
  $region2: #{gru_model_forward.1} parent=0 // pred_check
    _
  $region3: #{gru_model_forward.1} parent=0 // pred_check_branch
    %15 = sbr.rel (0) target = $region5
  $region4: #{gru_model_forward.1} parent=0 // pred_region
    _
  $region5: #{gru_model_forward.1} parent=0 // pred_fallthru
    _
  // Predicated region
  $region6: #{gru_model_forward.1} parent=0 // pred_check
    _
  $region7: #{gru_model_forward.1} parent=0 // pred_check_branch
    %17 = sbr.rel (0) target = $region9
  $region8: #{gru_model_forward.1} parent=0 // pred_region
    _
  $region9: #{gru_model_forward.1} parent=0 // pred_fallthru
    _
  // Predicated region
  $region10: #{gru_model_forward.1} parent=0 // pred_check
    _
  $region11: #{gru_model_forward.1} parent=0 // pred_check_branch
    %19 = sbr.rel (0) target = $region13
  $region12: #{gru_model_forward.1} parent=0 // pred_region
    _
  $region13: #{gru_model_forward.1} parent=0 // pred_fallthru
    _
  // Predicated region
  $region14: #{gru_model_forward.1} parent=0 // pred_check
    _
  $region15: #{gru_model_forward.1} parent=0 // pred_check_branch
    %21 = sbr.rel (0) target = $region17
  $region16: #{gru_model_forward.1} parent=0 // pred_region
    _
  $region17: #{gru_model_forward.1} parent=0 // pred_fallthru
    _
  // Predicated region
  $region18: #{gru_model_forward.1} parent=0 // pred_check
    _
  $region19: #{gru_model_forward.1} parent=0 // pred_check_branch
    %23 = sbr.rel (0) target = $region21
  $region20: #{gru_model_forward.1} parent=0 // pred_region
    _
  $region21: #{gru_model_forward.1} parent=0 // pred_fallthru
    _
  // Predicated region
  $region22: #{gru_model_forward.1} parent=0 // pred_check
    _
  $region23: #{gru_model_forward.1} parent=0 // pred_check_branch
    %25 = sbr.rel (0) target = $region25
  $region24: #{gru_model_forward.1} parent=0 // pred_region
    _
  $region25: #{gru_model_forward.1} parent=0 // pred_fallthru
    _
  // Predicated region
  $region26: #{gru_model_forward.1} parent=0 // pred_check
    _
  $region27: #{gru_model_forward.1} parent=0 // pred_check_branch
    %27 = sbr.rel (0) target = $region29
  $region28: #{gru_model_forward.1} parent=0 // pred_region
    _
  $region29: #{gru_model_forward.1} parent=0 // pred_fallthru
    _
  %v29 = vld [vmem:[%s0] sm:$0xf]
  %v30 = vld [vmem:[%s0 + $0x4] sm:$0xf]
  %v31 = vld [vmem:[%s0 + $0x8] sm:$0xf]
  %v32 = vld [vmem:[%s0 + $0xc] sm:$0xf]
  %v33 = vld [vmem:[%s0 + $0x10] sm:$0xf]
  %v34 = vld [vmem:[%s0 + $0x14] sm:$0xf]
  %v35 = vld [vmem:[%s0 + $0x18] sm:$0xf]
  %v36 = vld [vmem:[%s0 + $0x1c] sm:$0xf]
  %v37 = vld [vmem:[%s1] sm:$0x3f]
  %v38 = vld [vmem:[%s3] sm:$0x7]
  %v40 = vlaneseq
  %v41 = vshrl.u32 %v40, 7
  %v42 = vsub.s32 0, %v41
  %v43 = vrot.slane %v38, %v42
  %v44 = vlaneseq
  %v45 = vshrl.u32 %v44, 7
  %v46 = vsub.s32 1, %v45
  %v47 = vrot.slane %v38, %v46
  %v48 = vlaneseq
  %v49 = vshrl.u32 %v48, 7
  %v50 = vsub.s32 2, %v49
  %v51 = vrot.slane %v38, %v50
  %v63 = vunpack.c.l.b16 %v29
  %v64 = vunpack.c.l.b16 %v30
  %v65 = vunpack.c.l.b16 %v31
  %v66 = vunpack.c.l.b16 %v32
  %v67 = vunpack.c.l.b16 %v33
  %v68 = vunpack.c.l.b16 %v34
  %v69 = vunpack.c.l.b16 %v35
  %v70 = vunpack.c.l.b16 %v36
  %v71 = vpack.c.b16 %v64, %v63
  %v72 = vpack.c.b16 %v66, %v65
  %v73 = vpack.c.b16 %v68, %v67
  %v74 = vpack.c.b16 %v70, %v69
  %v76 = vcombine.high %v37, %v37
  %v78 = vunpack.c.l.s4 1983009808
  %v79 = vunpack.c.0.s8 %v78
  %v80 = vlaneseq
  %v81 = vshrl.u32 %v80, 7
  %v82 = vsub.s32 %v79, %v81
  %v83 = vrot.slane %v37, %v82
  %v85 = vunpack.c.l.s4 1983009808
  %v86 = vunpack.c.0.s8 %v85
  %v87 = vlaneseq
  %v88 = vshrl.u32 %v87, 7
  %v89 = vsub.s32 %v86, %v88
  %v90 = vrot.slane %v76, %v89
  %v91 = vcombine.high %v83, %v83
  %vm92 = vcmask 31744
  %v94 = vsel %vm92, %v71, 0
  %v97 = vsel %vm92, %v72, 0
  %v100 = vsel %vm92, %v73, 0
  %v103 = vsel %vm92, %v74, 0
  %vm105 = vcmask 1041408
  %v107 = vsel %vm105, %v83, 0
  %v110 = vsel %vm105, %v91, 0
  %v113 = vsel %vm105, %v90, 0
  %115 = vmatprep.subr.bf16.mxu0 0
  %116 = vmatpush1.bf16.msra.mxu0 0
  %117 = vmatprep.subr.bf16.mxu0 0
  %118 = vmatpush1.bf16.msra.mxu0 0
  %119 = vmatprep.subr.bf16.mxu0 0
  %120 = vmatpush1.bf16.msra.mxu0 0
  %121 = vmatprep.subr.bf16.mxu0 0
  %122 = vmatpush1.bf16.msra.mxu0 0
  %123 = vmatprep.subr.bf16.mxu0 0
  %124 = vmatpush1.bf16.msra.mxu0 0
  %125 = vmatprep.subr.bf16.mxu0 0
  %126 = vmatpush1.bf16.msra.mxu0 0
  %127 = vmatprep.subr.bf16.mxu0 0
  %128 = vmatpush1.bf16.msra.mxu0 0
  %129 = vmatprep.subr.bf16.mxu0 %v110
  %130 = vmatpush1.bf16.msra.mxu0 %v107
  %131 = vmatprep.subr.bf16.mxu0 0
  %132 = vmatpush2.bf16.msra.mxu0 0
  %133 = vmatprep.subr.bf16.mxu0 0
  %134 = vmatpush2.bf16.msra.mxu0 0
  %135 = vmatprep.subr.bf16.mxu0 0
  %136 = vmatpush2.bf16.msra.mxu0 0
  %137 = vmatprep.subr.bf16.mxu0 0
  %138 = vmatpush2.bf16.msra.mxu0 0
  %139 = vmatprep.subr.bf16.mxu0 0
  %140 = vmatpush2.bf16.msra.mxu0 0
  %141 = vmatprep.subr.bf16.mxu0 0
  %142 = vmatpush2.bf16.msra.mxu0 0
  %143 = vmatprep.subr.bf16.mxu0 0
  %144 = vmatpush2.bf16.msra.mxu0 0
  %145 = vmatprep.subr.bf16.mxu0 0
  %146 = vmatpush2.bf16.msra.mxu0 0
  %147 = vmatprep.mubr.bf16.mxu0 0
  %148 = vmatmul.mubr.bf16.gmra.mxu0 %v94
  %v149 = vpop.f32.mrf.mxu0
  %v150 = vadd.f32 %v43, %v149
  %v151 = vpop.f32.mrf.mxu0
  %v152 = vadd.f32 %v47, %v151
  %v153 = vpop.f32.mrf.mxu0
  %v154 = vadd.f32 %v43, %v153
  %v155 = vpop.f32.mrf.mxu0
  %v156 = vadd.f32 %v47, %v155
  %157 = vmatprep.mubr.bf16.mxu0 0
  %158 = vmatmul.mubr.bf16.gmra.mxu0 %v97
  %v159 = vpop.f32.mrf.mxu0
  %v160 = vadd.f32 %v43, %v159
  %v161 = vpop.f32.mrf.mxu0
  %v162 = vadd.f32 %v47, %v161
  %v163 = vpop.f32.mrf.mxu0
  %v164 = vadd.f32 %v43, %v163
  %v165 = vpop.f32.mrf.mxu0
  %v166 = vadd.f32 %v47, %v165
  %167 = vmatprep.mubr.bf16.mxu0 0
  %168 = vmatmul.mubr.bf16.gmra.mxu0 %v100
  %v169 = vpop.f32.mrf.mxu0
  %v170 = vadd.f32 %v43, %v169
  %v171 = vpop.f32.mrf.mxu0
  %v172 = vadd.f32 %v47, %v171
  %v173 = vpop.f32.mrf.mxu0
  %v174 = vadd.f32 %v43, %v173
  %v175 = vpop.f32.mrf.mxu0
  %v176 = vadd.f32 %v47, %v175
  %177 = vmatprep.mubr.bf16.mxu0 0
  %178 = vmatmul.mubr.bf16.gmra.mxu0 %v103
  %v179 = vpop.f32.mrf.mxu0
  %v180 = vadd.f32 %v43, %v179
  %v181 = vpop.f32.mrf.mxu0
  %v182 = vadd.f32 %v47, %v181
  %v183 = vpop.f32.mrf.mxu0
  %v184 = vadd.f32 %v43, %v183
  %v185 = vpop.f32.mrf.mxu0
  %v186 = vadd.f32 %v47, %v185
  %187 = vdwg.mxu0
  %188 = vmatprep.subr.bf16.mxu0 0
  %189 = vmatpush1.bf16.msra.mxu0 0
  %190 = vmatprep.subr.bf16.mxu0 0
  %191 = vmatpush1.bf16.msra.mxu0 0
  %192 = vmatprep.subr.bf16.mxu0 0
  %193 = vmatpush1.bf16.msra.mxu0 0
  %194 = vmatprep.subr.bf16.mxu0 0
  %195 = vmatpush1.bf16.msra.mxu0 0
  %196 = vmatprep.subr.bf16.mxu0 0
  %197 = vmatpush1.bf16.msra.mxu0 0
  %198 = vmatprep.subr.bf16.mxu0 0
  %199 = vmatpush1.bf16.msra.mxu0 0
  %200 = vmatprep.subr.bf16.mxu0 0
  %201 = vmatpush1.bf16.msra.mxu0 0
  %202 = vmatprep.subr.bf16.mxu0 0
  %203 = vmatpush1.bf16.msra.mxu0 %v113
  %204 = vmatprep.subr.bf16.mxu0 0
  %205 = vmatpush2.bf16.msra.mxu0 0
  %206 = vmatprep.subr.bf16.mxu0 0
  %207 = vmatpush2.bf16.msra.mxu0 0
  %208 = vmatprep.subr.bf16.mxu0 0
  %209 = vmatpush2.bf16.msra.mxu0 0
  %210 = vmatprep.subr.bf16.mxu0 0
  %211 = vmatpush2.bf16.msra.mxu0 0
  %212 = vmatprep.subr.bf16.mxu0 0
  %213 = vmatpush2.bf16.msra.mxu0 0
  %214 = vmatprep.subr.bf16.mxu0 0
  %215 = vmatpush2.bf16.msra.mxu0 0
  %216 = vmatprep.subr.bf16.mxu0 0
  %217 = vmatpush2.bf16.msra.mxu0 0
  %218 = vmatprep.subr.bf16.mxu0 0
  %219 = vmatpush2.bf16.msra.mxu0 0
  %220 = vmatprep.mubr.bf16.mxu0 0
  %221 = vmatmul.mubr.bf16.gmra.mxu0 %v94
  %v222 = vpop.f32.mrf.mxu0
  %v223 = vadd.f32 %v51, %v222
  %v224 = vpop.f32.mrf.mxu0
  %v225 = vpop.f32.mrf.mxu0
  %v226 = vadd.f32 %v51, %v225
  %v227 = vpop.f32.mrf.mxu0
  %228 = vmatprep.mubr.bf16.mxu0 0
  %229 = vmatmul.mubr.bf16.gmra.mxu0 %v97
  %v230 = vpop.f32.mrf.mxu0
  %v231 = vadd.f32 %v51, %v230
  %v232 = vpop.f32.mrf.mxu0
  %v233 = vpop.f32.mrf.mxu0
  %v234 = vadd.f32 %v51, %v233
  %v235 = vpop.f32.mrf.mxu0
  %236 = vmatprep.mubr.bf16.mxu0 0
  %237 = vmatmul.mubr.bf16.gmra.mxu0 %v100
  %v238 = vpop.f32.mrf.mxu0
  %v239 = vadd.f32 %v51, %v238
  %v240 = vpop.f32.mrf.mxu0
  %v241 = vpop.f32.mrf.mxu0
  %v242 = vadd.f32 %v51, %v241
  %v243 = vpop.f32.mrf.mxu0
  %244 = vmatprep.mubr.bf16.mxu0 0
  %245 = vmatmul.mubr.bf16.gmra.mxu0 %v103
  %v246 = vpop.f32.mrf.mxu0
  %v247 = vadd.f32 %v51, %v246
  %v248 = vpop.f32.mrf.mxu0
  %v249 = vpop.f32.mrf.mxu0
  %v250 = vadd.f32 %v51, %v249
  %v251 = vpop.f32.mrf.mxu0
  %252 = vdwg.mxu0
  %253 = vst [vmem:[#allocation2] sm:$0xff] %v150
  %254 = vst [vmem:[#allocation2 + $0x8] sm:$0xff] %v152
  %255 = vst [vmem:[#allocation2 + $0x10] sm:$0xff] %v223
  %256 = vst [vmem:[#allocation2 + $0x18] sm:$0xff] %v154
  %257 = vst [vmem:[#allocation2 + $0x20] sm:$0xff] %v156
  %258 = vst [vmem:[#allocation2 + $0x28] sm:$0xff] %v226
  %259 = vst [vmem:[#allocation2 + $0x30] sm:$0xff] %v160
  %260 = vst [vmem:[#allocation2 + $0x38] sm:$0xff] %v162
  %261 = vst [vmem:[#allocation2 + $0x40] sm:$0xff] %v231
  %262 = vst [vmem:[#allocation2 + $0x48] sm:$0xff] %v164
  %263 = vst [vmem:[#allocation2 + $0x50] sm:$0xff] %v166
  %264 = vst [vmem:[#allocation2 + $0x58] sm:$0xff] %v234
  %265 = vst [vmem:[#allocation2 + $0x60] sm:$0xff] %v170
  %266 = vst [vmem:[#allocation2 + $0x68] sm:$0xff] %v172
  %267 = vst [vmem:[#allocation2 + $0x70] sm:$0xff] %v239
  %268 = vst [vmem:[#allocation2 + $0x78] sm:$0xff] %v174
  %269 = vst [vmem:[#allocation2 + $0x80] sm:$0xff] %v176
  %270 = vst [vmem:[#allocation2 + $0x88] sm:$0xff] %v242
  %271 = vst [vmem:[#allocation2 + $0x90] sm:$0xff] %v180
  %272 = vst [vmem:[#allocation2 + $0x98] sm:$0xff] %v182
  %273 = vst [vmem:[#allocation2 + $0xa0] sm:$0xff] %v247
  %274 = vst [vmem:[#allocation2 + $0xa8] sm:$0xff] %v184
  %275 = vst [vmem:[#allocation2 + $0xb0] sm:$0xff] %v186
  %276 = vst [vmem:[#allocation2 + $0xb8] sm:$0xff] %v250
  %v277 = vld [vmem:[%s4] sm:$0x1]
  %v279 = vlaneseq
  %v280 = vshrl.u32 %v279, 7
  %v281 = vsub.s32 0, %v280
  %v282 = vrot.slane %v277, %v281
  %v284 = vld [vmem:[#allocation2] sm:$0xff]
  %v285 = vld [vmem:[#allocation2 + $0x8] sm:$0xff]
  %v286 = vld [vmem:[#allocation2 + $0x10] sm:$0xff]
  %v287 = vld [vmem:[%s2] sm:$0xff]
  %v288 = vld [vmem:[%s2 + $0x8] sm:$0xf]
  %v289 = vld [vmem:[%s2 + $0xc] sm:$0xff]
  %v290 = vld [vmem:[%s2 + $0x14] sm:$0xf]
  %v291 = vld [vmem:[%s2 + $0x18] sm:$0xff]
  %v292 = vld [vmem:[%s2 + $0x20] sm:$0xf]
  %v293 = vld [vmem:[%s2 + $0x24] sm:$0xff]
  %v294 = vld [vmem:[%s2 + $0x2c] sm:$0xf]
  %v295 = vld [vmem:[%s2 + $0x30] sm:$0xff]
  %v296 = vld [vmem:[%s2 + $0x38] sm:$0xf]
  %v297 = vld [vmem:[%s2 + $0x3c] sm:$0xff]
  %v298 = vld [vmem:[%s2 + $0x44] sm:$0xf]
  %v299 = vld [vmem:[%s2 + $0x48] sm:$0xff]
  %v300 = vld [vmem:[%s2 + $0x50] sm:$0xf]
  %v301 = vld [vmem:[%s2 + $0x54] sm:$0xff]
  %v302 = vld [vmem:[%s2 + $0x5c] sm:$0xf]
  %v303 = vld [vmem:[%s2 + $0x60] sm:$0xff]
  %v304 = vld [vmem:[%s2 + $0x68] sm:$0xf]
  %v305 = vld [vmem:[%s2 + $0x6c] sm:$0xff]
  %v306 = vld [vmem:[%s2 + $0x74] sm:$0xf]
  %v307 = vld [vmem:[%s2 + $0x78] sm:$0xff]
  %v308 = vld [vmem:[%s2 + $0x80] sm:$0xf]
  %v309 = vld [vmem:[%s2 + $0x84] sm:$0xff]
  %v310 = vld [vmem:[%s2 + $0x8c] sm:$0xf]
  %v311 = vld [vmem:[%s2 + $0x90] sm:$0xff]
  %v312 = vld [vmem:[%s2 + $0x98] sm:$0xf]
  %v313 = vld [vmem:[%s2 + $0x9c] sm:$0xff]
  %v314 = vld [vmem:[%s2 + $0xa4] sm:$0xf]
  %v315 = vld [vmem:[%s2 + $0xa8] sm:$0xff]
  %v316 = vld [vmem:[%s2 + $0xb0] sm:$0xf]
  %v317 = vld [vmem:[%s2 + $0xb4] sm:$0xff]
  %v318 = vld [vmem:[%s2 + $0xbc] sm:$0xf]
  %v351 = vunpack.c.l.b16 %v287
  %v352 = vunpack.c.h.b16 %v287
  %v353 = vunpack.c.l.b16 %v288
  %v354 = vunpack.c.l.b16 %v289
  %v355 = vunpack.c.h.b16 %v289
  %v356 = vunpack.c.l.b16 %v290
  %v357 = vunpack.c.l.b16 %v291
  %v358 = vunpack.c.h.b16 %v291
  %v359 = vunpack.c.l.b16 %v292
  %v360 = vunpack.c.l.b16 %v293
  %v361 = vunpack.c.h.b16 %v293
  %v362 = vunpack.c.l.b16 %v294
  %v363 = vunpack.c.l.b16 %v295
  %v364 = vunpack.c.h.b16 %v295
  %v365 = vunpack.c.l.b16 %v296
  %v366 = vunpack.c.l.b16 %v297
  %v367 = vunpack.c.h.b16 %v297
  %v368 = vunpack.c.l.b16 %v298
  %v369 = vunpack.c.l.b16 %v299
  %v370 = vunpack.c.h.b16 %v299
  %v371 = vunpack.c.l.b16 %v300
  %v372 = vunpack.c.l.b16 %v301
  %v373 = vunpack.c.h.b16 %v301
  %v374 = vunpack.c.l.b16 %v302
  %v375 = vunpack.c.l.b16 %v303
  %v376 = vunpack.c.h.b16 %v303
  %v377 = vunpack.c.l.b16 %v304
  %v378 = vunpack.c.l.b16 %v305
  %v379 = vunpack.c.h.b16 %v305
  %v380 = vunpack.c.l.b16 %v306
  %v381 = vunpack.c.l.b16 %v307
  %v382 = vunpack.c.h.b16 %v307
  %v383 = vunpack.c.l.b16 %v308
  %v384 = vunpack.c.l.b16 %v309
  %v385 = vunpack.c.h.b16 %v309
  %v386 = vunpack.c.l.b16 %v310
  %v387 = vunpack.c.l.b16 %v311
  %v388 = vunpack.c.h.b16 %v311
  %v389 = vunpack.c.l.b16 %v312
  %v390 = vunpack.c.l.b16 %v313
  %v391 = vunpack.c.h.b16 %v313
  %v392 = vunpack.c.l.b16 %v314
  %v393 = vunpack.c.l.b16 %v315
  %v394 = vunpack.c.h.b16 %v315
  %v395 = vunpack.c.l.b16 %v316
  %v396 = vunpack.c.l.b16 %v317
  %v397 = vunpack.c.h.b16 %v317
  %v398 = vunpack.c.l.b16 %v318
  %v399 = vpack.c.b16 %v354, %v351
  %v400 = vpack.c.b16 %v355, %v352
  %v401 = vpack.c.b16 %v356, %v353
  %v402 = vpack.c.b16 %v360, %v357
  %v403 = vpack.c.b16 %v361, %v358
  %v404 = vpack.c.b16 %v362, %v359
  %v405 = vpack.c.b16 %v366, %v363
  %v406 = vpack.c.b16 %v367, %v364
  %v407 = vpack.c.b16 %v368, %v365
  %v408 = vpack.c.b16 %v372, %v369
  %v409 = vpack.c.b16 %v373, %v370
  %v410 = vpack.c.b16 %v374, %v371
  %v411 = vpack.c.b16 %v378, %v375
  %v412 = vpack.c.b16 %v379, %v376
  %v413 = vpack.c.b16 %v380, %v377
  %v414 = vpack.c.b16 %v384, %v381
  %v415 = vpack.c.b16 %v385, %v382
  %v416 = vpack.c.b16 %v386, %v383
  %v417 = vpack.c.b16 %v390, %v387
  %v418 = vpack.c.b16 %v391, %v388
  %v419 = vpack.c.b16 %v392, %v389
  %v420 = vpack.c.b16 %v396, %v393
  %v421 = vpack.c.b16 %v397, %v394
  %v422 = vpack.c.b16 %v398, %v395
  %447 = vmatprep.subr.bf16.mxu0 %v421
  %448 = vmatpush1.bf16.msra.mxu0 %v420
  %449 = vmatprep.subr.bf16.mxu0 %v418
  %450 = vmatpush1.bf16.msra.mxu0 %v417
  %451 = vmatprep.subr.bf16.mxu0 %v415
  %452 = vmatpush1.bf16.msra.mxu0 %v414
  %453 = vmatprep.subr.bf16.mxu0 %v412
  %454 = vmatpush1.bf16.msra.mxu0 %v411
  %455 = vmatprep.subr.bf16.mxu0 %v409
  %456 = vmatpush1.bf16.msra.mxu0 %v408
  %457 = vmatprep.subr.bf16.mxu0 %v406
  %458 = vmatpush1.bf16.msra.mxu0 %v405
  %459 = vmatprep.subr.bf16.mxu0 %v403
  %460 = vmatpush1.bf16.msra.mxu0 %v402
  %461 = vmatprep.subr.bf16.mxu0 %v400
  %462 = vmatpush1.bf16.msra.mxu0 %v399
  %463 = vmatprep.subr.bf16.mxu0 0
  %464 = vmatpush2.bf16.msra.mxu0 0
  %465 = vmatprep.subr.bf16.mxu0 0
  %466 = vmatpush2.bf16.msra.mxu0 0
  %467 = vmatprep.subr.bf16.mxu0 0
  %468 = vmatpush2.bf16.msra.mxu0 0
  %469 = vmatprep.subr.bf16.mxu0 0
  %470 = vmatpush2.bf16.msra.mxu0 0
  %471 = vmatprep.subr.bf16.mxu0 0
  %472 = vmatpush2.bf16.msra.mxu0 0
  %473 = vmatprep.subr.bf16.mxu0 0
  %474 = vmatpush2.bf16.msra.mxu0 0
  %475 = vmatprep.subr.bf16.mxu0 0
  %476 = vmatpush2.bf16.msra.mxu0 0
  %477 = vmatprep.subr.bf16.mxu0 0
  %478 = vmatpush2.bf16.msra.mxu0 0
  %479 = vmatprep.mubr.bf16.mxu0 0
  %480 = vmatmul.mubr.bf16.gmra.mxu0 0
  %v481 = vpop.f32.mrf.mxu0
  %v482 = vadd.f32 0.0, %v481
  %v483 = vpop.f32.mrf.mxu0
  %v484 = vadd.f32 0.0, %v483
  %v485 = vpop.f32.mrf.mxu0
  %v486 = vpop.f32.mrf.mxu0
  %487 = vdwg.mxu0
  %488 = vmatprep.subr.bf16.mxu0 0
  %489 = vmatpush1.bf16.msra.mxu0 %v422
  %490 = vmatprep.subr.bf16.mxu0 0
  %491 = vmatpush1.bf16.msra.mxu0 %v419
  %492 = vmatprep.subr.bf16.mxu0 0
  %493 = vmatpush1.bf16.msra.mxu0 %v416
  %494 = vmatprep.subr.bf16.mxu0 0
  %495 = vmatpush1.bf16.msra.mxu0 %v413
  %496 = vmatprep.subr.bf16.mxu0 0
  %497 = vmatpush1.bf16.msra.mxu0 %v410
  %498 = vmatprep.subr.bf16.mxu0 0
  %499 = vmatpush1.bf16.msra.mxu0 %v407
  %500 = vmatprep.subr.bf16.mxu0 0
  %501 = vmatpush1.bf16.msra.mxu0 %v404
  %502 = vmatprep.subr.bf16.mxu0 0
  %503 = vmatpush1.bf16.msra.mxu0 %v401
  %504 = vmatprep.subr.bf16.mxu0 0
  %505 = vmatpush2.bf16.msra.mxu0 0
  %506 = vmatprep.subr.bf16.mxu0 0
  %507 = vmatpush2.bf16.msra.mxu0 0
  %508 = vmatprep.subr.bf16.mxu0 0
  %509 = vmatpush2.bf16.msra.mxu0 0
  %510 = vmatprep.subr.bf16.mxu0 0
  %511 = vmatpush2.bf16.msra.mxu0 0
  %512 = vmatprep.subr.bf16.mxu0 0
  %513 = vmatpush2.bf16.msra.mxu0 0
  %514 = vmatprep.subr.bf16.mxu0 0
  %515 = vmatpush2.bf16.msra.mxu0 0
  %516 = vmatprep.subr.bf16.mxu0 0
  %517 = vmatpush2.bf16.msra.mxu0 0
  %518 = vmatprep.subr.bf16.mxu0 0
  %519 = vmatpush2.bf16.msra.mxu0 0
  %520 = vmatprep.mubr.bf16.mxu0 0
  %521 = vmatmul.mubr.bf16.gmra.mxu0 0
  %v522 = vpop.f32.mrf.mxu0
  %v523 = vadd.f32 0.0, %v522
  %v524 = vpop.f32.mrf.mxu0
  %v525 = vpop.f32.mrf.mxu0
  %v526 = vpop.f32.mrf.mxu0
  %527 = vdwg.mxu0
  %v528 = vadd.f32 %v284, %v482
  %v529 = vxor.u32 %v528, 2147483648
  %v530 = vmul.f32 %v529, 1.442695
  %v531 = vpow.pop %v530
  %v532 = vadd.f32 %v531, 1.0
  %v533 = vrcp.pop %v532
  %v534 = vmul.f32 1.0, %v533
  %v535 = vadd.f32 %v285, %v484
  %v536 = vxor.u32 %v535, 2147483648
  %v537 = vmul.f32 %v536, 1.442695
  %v538 = vpow.pop %v537
  %v539 = vadd.f32 %v538, 1.0
  %v540 = vrcp.pop %v539
  %v541 = vmul.f32 1.0, %v540
  %v542 = vadd.f32 %v523, %v282
  %v543 = vmul.f32 %v534, %v542
  %v544 = vadd.f32 %v286, %v543
  %v545 = vtanh.pop %v544
  %v546 = vsub.f32 0.0, %v545
  %v547 = vmul.f32 %v541, %v546
  %v548 = vadd.f32 %v545, %v547
  %v549 = vld [vmem:[#allocation2 + $0x18] sm:$0xff]
  %v550 = vld [vmem:[#allocation2 + $0x20] sm:$0xff]
  %v551 = vld [vmem:[#allocation2 + $0x28] sm:$0xff]
  %v552 = vpack.c.bf16 %v548, %v548
  %553 = vmatprep.subr.bf16.mxu0 %v421
  %554 = vmatpush1.bf16.msra.mxu0 %v420
  %555 = vmatprep.subr.bf16.mxu0 %v418
  %556 = vmatpush1.bf16.msra.mxu0 %v417
  %557 = vmatprep.subr.bf16.mxu0 %v415
  %558 = vmatpush1.bf16.msra.mxu0 %v414
  %559 = vmatprep.subr.bf16.mxu0 %v412
  %560 = vmatpush1.bf16.msra.mxu0 %v411
  %561 = vmatprep.subr.bf16.mxu0 %v409
  %562 = vmatpush1.bf16.msra.mxu0 %v408
  %563 = vmatprep.subr.bf16.mxu0 %v406
  %564 = vmatpush1.bf16.msra.mxu0 %v405
  %565 = vmatprep.subr.bf16.mxu0 %v403
  %566 = vmatpush1.bf16.msra.mxu0 %v402
  %567 = vmatprep.subr.bf16.mxu0 %v400
  %568 = vmatpush1.bf16.msra.mxu0 %v399
  %569 = vmatprep.subr.bf16.mxu0 0
  %570 = vmatpush2.bf16.msra.mxu0 0
  %571 = vmatprep.subr.bf16.mxu0 0
  %572 = vmatpush2.bf16.msra.mxu0 0
  %573 = vmatprep.subr.bf16.mxu0 0
  %574 = vmatpush2.bf16.msra.mxu0 0
  %575 = vmatprep.subr.bf16.mxu0 0
  %576 = vmatpush2.bf16.msra.mxu0 0
  %577 = vmatprep.subr.bf16.mxu0 0
  %578 = vmatpush2.bf16.msra.mxu0 0
  %579 = vmatprep.subr.bf16.mxu0 0
  %580 = vmatpush2.bf16.msra.mxu0 0
  %581 = vmatprep.subr.bf16.mxu0 0
  %582 = vmatpush2.bf16.msra.mxu0 0
  %583 = vmatprep.subr.bf16.mxu0 0
  %584 = vmatpush2.bf16.msra.mxu0 0
  %585 = vmatprep.mubr.bf16.mxu0 0
  %586 = vmatmul.mubr.bf16.gmra.mxu0 %v552
  %v587 = vpop.f32.mrf.mxu0
  %v588 = vadd.f32 0.0, %v587
  %v589 = vpop.f32.mrf.mxu0
  %v590 = vadd.f32 0.0, %v589
  %v591 = vpop.f32.mrf.mxu0
  %v592 = vpop.f32.mrf.mxu0
  %593 = vdwg.mxu0
  %594 = vmatprep.subr.bf16.mxu0 0
  %595 = vmatpush1.bf16.msra.mxu0 %v422
  %596 = vmatprep.subr.bf16.mxu0 0
  %597 = vmatpush1.bf16.msra.mxu0 %v419
  %598 = vmatprep.subr.bf16.mxu0 0
  %599 = vmatpush1.bf16.msra.mxu0 %v416
  %600 = vmatprep.subr.bf16.mxu0 0
  %601 = vmatpush1.bf16.msra.mxu0 %v413
  %602 = vmatprep.subr.bf16.mxu0 0
  %603 = vmatpush1.bf16.msra.mxu0 %v410
  %604 = vmatprep.subr.bf16.mxu0 0
  %605 = vmatpush1.bf16.msra.mxu0 %v407
  %606 = vmatprep.subr.bf16.mxu0 0
  %607 = vmatpush1.bf16.msra.mxu0 %v404
  %608 = vmatprep.subr.bf16.mxu0 0
  %609 = vmatpush1.bf16.msra.mxu0 %v401
  %610 = vmatprep.subr.bf16.mxu0 0
  %611 = vmatpush2.bf16.msra.mxu0 0
  %612 = vmatprep.subr.bf16.mxu0 0
  %613 = vmatpush2.bf16.msra.mxu0 0
  %614 = vmatprep.subr.bf16.mxu0 0
  %615 = vmatpush2.bf16.msra.mxu0 0
  %616 = vmatprep.subr.bf16.mxu0 0
  %617 = vmatpush2.bf16.msra.mxu0 0
  %618 = vmatprep.subr.bf16.mxu0 0
  %619 = vmatpush2.bf16.msra.mxu0 0
  %620 = vmatprep.subr.bf16.mxu0 0
  %621 = vmatpush2.bf16.msra.mxu0 0
  %622 = vmatprep.subr.bf16.mxu0 0
  %623 = vmatpush2.bf16.msra.mxu0 0
  %624 = vmatprep.subr.bf16.mxu0 0
  %625 = vmatpush2.bf16.msra.mxu0 0
  %626 = vmatprep.mubr.bf16.mxu0 0
  %627 = vmatmul.mubr.bf16.gmra.mxu0 %v552
  %v628 = vpop.f32.mrf.mxu0
  %v629 = vadd.f32 0.0, %v628
  %v630 = vpop.f32.mrf.mxu0
  %v631 = vpop.f32.mrf.mxu0
  %v632 = vpop.f32.mrf.mxu0
  %633 = vdwg.mxu0
  %v634 = vadd.f32 %v549, %v588
  %v635 = vxor.u32 %v634, 2147483648
  %v636 = vmul.f32 %v635, 1.442695
  %v637 = vpow.pop %v636
  %v638 = vadd.f32 %v637, 1.0
  %v639 = vrcp.pop %v638
  %v640 = vmul.f32 1.0, %v639
  %v641 = vadd.f32 %v550, %v590
  %v642 = vxor.u32 %v641, 2147483648
  %v643 = vmul.f32 %v642, 1.442695
  %v644 = vpow.pop %v643
  %v645 = vadd.f32 %v644, 1.0
  %v646 = vrcp.pop %v645
  %v647 = vmul.f32 1.0, %v646
  %v648 = vadd.f32 %v629, %v282
  %v649 = vmul.f32 %v640, %v648
  %v650 = vadd.f32 %v551, %v649
  %v651 = vtanh.pop %v650
  %v652 = vsub.f32 %v548, %v651
  %v653 = vmul.f32 %v647, %v652
  %v654 = vadd.f32 %v651, %v653
  %v655 = vld [vmem:[#allocation2 + $0x30] sm:$0xff]
  %v656 = vld [vmem:[#allocation2 + $0x38] sm:$0xff]
  %v657 = vld [vmem:[#allocation2 + $0x40] sm:$0xff]
  %v658 = vpack.c.bf16 %v654, %v654
  %659 = vmatprep.subr.bf16.mxu0 %v421
  %660 = vmatpush1.bf16.msra.mxu0 %v420
  %661 = vmatprep.subr.bf16.mxu0 %v418
  %662 = vmatpush1.bf16.msra.mxu0 %v417
  %663 = vmatprep.subr.bf16.mxu0 %v415
  %664 = vmatpush1.bf16.msra.mxu0 %v414
  %665 = vmatprep.subr.bf16.mxu0 %v412
  %666 = vmatpush1.bf16.msra.mxu0 %v411
  %667 = vmatprep.subr.bf16.mxu0 %v409
  %668 = vmatpush1.bf16.msra.mxu0 %v408
  %669 = vmatprep.subr.bf16.mxu0 %v406
  %670 = vmatpush1.bf16.msra.mxu0 %v405
  %671 = vmatprep.subr.bf16.mxu0 %v403
  %672 = vmatpush1.bf16.msra.mxu0 %v402
  %673 = vmatprep.subr.bf16.mxu0 %v400
  %674 = vmatpush1.bf16.msra.mxu0 %v399
  %675 = vmatprep.subr.bf16.mxu0 0
  %676 = vmatpush2.bf16.msra.mxu0 0
  %677 = vmatprep.subr.bf16.mxu0 0
  %678 = vmatpush2.bf16.msra.mxu0 0
  %679 = vmatprep.subr.bf16.mxu0 0
  %680 = vmatpush2.bf16.msra.mxu0 0
  %681 = vmatprep.subr.bf16.mxu0 0
  %682 = vmatpush2.bf16.msra.mxu0 0
  %683 = vmatprep.subr.bf16.mxu0 0
  %684 = vmatpush2.bf16.msra.mxu0 0
  %685 = vmatprep.subr.bf16.mxu0 0
  %686 = vmatpush2.bf16.msra.mxu0 0
  %687 = vmatprep.subr.bf16.mxu0 0
  %688 = vmatpush2.bf16.msra.mxu0 0
  %689 = vmatprep.subr.bf16.mxu0 0
  %690 = vmatpush2.bf16.msra.mxu0 0
  %691 = vmatprep.mubr.bf16.mxu0 0
  %692 = vmatmul.mubr.bf16.gmra.mxu0 %v658
  %v693 = vpop.f32.mrf.mxu0
  %v694 = vadd.f32 0.0, %v693
  %v695 = vpop.f32.mrf.mxu0
  %v696 = vadd.f32 0.0, %v695
  %v697 = vpop.f32.mrf.mxu0
  %v698 = vpop.f32.mrf.mxu0
  %699 = vdwg.mxu0
  %700 = vmatprep.subr.bf16.mxu0 0
  %701 = vmatpush1.bf16.msra.mxu0 %v422
  %702 = vmatprep.subr.bf16.mxu0 0
  %703 = vmatpush1.bf16.msra.mxu0 %v419
  %704 = vmatprep.subr.bf16.mxu0 0
  %705 = vmatpush1.bf16.msra.mxu0 %v416
  %706 = vmatprep.subr.bf16.mxu0 0
  %707 = vmatpush1.bf16.msra.mxu0 %v413
  %708 = vmatprep.subr.bf16.mxu0 0
  %709 = vmatpush1.bf16.msra.mxu0 %v410
  %710 = vmatprep.subr.bf16.mxu0 0
  %711 = vmatpush1.bf16.msra.mxu0 %v407
  %712 = vmatprep.subr.bf16.mxu0 0
  %713 = vmatpush1.bf16.msra.mxu0 %v404
  %714 = vmatprep.subr.bf16.mxu0 0
  %715 = vmatpush1.bf16.msra.mxu0 %v401
  %716 = vmatprep.subr.bf16.mxu0 0
  %717 = vmatpush2.bf16.msra.mxu0 0
  %718 = vmatprep.subr.bf16.mxu0 0
  %719 = vmatpush2.bf16.msra.mxu0 0
  %720 = vmatprep.subr.bf16.mxu0 0
  %721 = vmatpush2.bf16.msra.mxu0 0
  %722 = vmatprep.subr.bf16.mxu0 0
  %723 = vmatpush2.bf16.msra.mxu0 0
  %724 = vmatprep.subr.bf16.mxu0 0
  %725 = vmatpush2.bf16.msra.mxu0 0
  %726 = vmatprep.subr.bf16.mxu0 0
  %727 = vmatpush2.bf16.msra.mxu0 0
  %728 = vmatprep.subr.bf16.mxu0 0
  %729 = vmatpush2.bf16.msra.mxu0 0
  %730 = vmatprep.subr.bf16.mxu0 0
  %731 = vmatpush2.bf16.msra.mxu0 0
  %732 = vmatprep.mubr.bf16.mxu0 0
  %733 = vmatmul.mubr.bf16.gmra.mxu0 %v658
  %v734 = vpop.f32.mrf.mxu0
  %v735 = vadd.f32 0.0, %v734
  %v736 = vpop.f32.mrf.mxu0
  %v737 = vpop.f32.mrf.mxu0
  %v738 = vpop.f32.mrf.mxu0
  %739 = vdwg.mxu0
  %v740 = vadd.f32 %v655, %v694
  %v741 = vxor.u32 %v740, 2147483648
  %v742 = vmul.f32 %v741, 1.442695
  %v743 = vpow.pop %v742
  %v744 = vadd.f32 %v743, 1.0
  %v745 = vrcp.pop %v744
  %v746 = vmul.f32 1.0, %v745
  %v747 = vadd.f32 %v656, %v696
  %v748 = vxor.u32 %v747, 2147483648
  %v749 = vmul.f32 %v748, 1.442695
  %v750 = vpow.pop %v749
  %v751 = vadd.f32 %v750, 1.0
  %v752 = vrcp.pop %v751
  %v753 = vmul.f32 1.0, %v752
  %v754 = vadd.f32 %v735, %v282
  %v755 = vmul.f32 %v746, %v754
  %v756 = vadd.f32 %v657, %v755
  %v757 = vtanh.pop %v756
  %v758 = vsub.f32 %v654, %v757
  %v759 = vmul.f32 %v753, %v758
  %v760 = vadd.f32 %v757, %v759
  %v761 = vld [vmem:[#allocation2 + $0x48] sm:$0xff]
  %v762 = vld [vmem:[#allocation2 + $0x50] sm:$0xff]
  %v763 = vld [vmem:[#allocation2 + $0x58] sm:$0xff]
  %v764 = vpack.c.bf16 %v760, %v760
  %765 = vmatprep.subr.bf16.mxu0 %v421
  %766 = vmatpush1.bf16.msra.mxu0 %v420
  %767 = vmatprep.subr.bf16.mxu0 %v418
  %768 = vmatpush1.bf16.msra.mxu0 %v417
  %769 = vmatprep.subr.bf16.mxu0 %v415
  %770 = vmatpush1.bf16.msra.mxu0 %v414
  %771 = vmatprep.subr.bf16.mxu0 %v412
  %772 = vmatpush1.bf16.msra.mxu0 %v411
  %773 = vmatprep.subr.bf16.mxu0 %v409
  %774 = vmatpush1.bf16.msra.mxu0 %v408
  %775 = vmatprep.subr.bf16.mxu0 %v406
  %776 = vmatpush1.bf16.msra.mxu0 %v405
  %777 = vmatprep.subr.bf16.mxu0 %v403
  %778 = vmatpush1.bf16.msra.mxu0 %v402
  %779 = vmatprep.subr.bf16.mxu0 %v400
  %780 = vmatpush1.bf16.msra.mxu0 %v399
  %781 = vmatprep.subr.bf16.mxu0 0
  %782 = vmatpush2.bf16.msra.mxu0 0
  %783 = vmatprep.subr.bf16.mxu0 0
  %784 = vmatpush2.bf16.msra.mxu0 0
  %785 = vmatprep.subr.bf16.mxu0 0
  %786 = vmatpush2.bf16.msra.mxu0 0
  %787 = vmatprep.subr.bf16.mxu0 0
  %788 = vmatpush2.bf16.msra.mxu0 0
  %789 = vmatprep.subr.bf16.mxu0 0
  %790 = vmatpush2.bf16.msra.mxu0 0
  %791 = vmatprep.subr.bf16.mxu0 0
  %792 = vmatpush2.bf16.msra.mxu0 0
  %793 = vmatprep.subr.bf16.mxu0 0
  %794 = vmatpush2.bf16.msra.mxu0 0
  %795 = vmatprep.subr.bf16.mxu0 0
  %796 = vmatpush2.bf16.msra.mxu0 0
  %797 = vmatprep.mubr.bf16.mxu0 0
  %798 = vmatmul.mubr.bf16.gmra.mxu0 %v764
  %v799 = vpop.f32.mrf.mxu0
  %v800 = vadd.f32 0.0, %v799
  %v801 = vpop.f32.mrf.mxu0
  %v802 = vadd.f32 0.0, %v801
  %v803 = vpop.f32.mrf.mxu0
  %v804 = vpop.f32.mrf.mxu0
  %805 = vdwg.mxu0
  %806 = vmatprep.subr.bf16.mxu0 0
  %807 = vmatpush1.bf16.msra.mxu0 %v422
  %808 = vmatprep.subr.bf16.mxu0 0
  %809 = vmatpush1.bf16.msra.mxu0 %v419
  %810 = vmatprep.subr.bf16.mxu0 0
  %811 = vmatpush1.bf16.msra.mxu0 %v416
  %812 = vmatprep.subr.bf16.mxu0 0
  %813 = vmatpush1.bf16.msra.mxu0 %v413
  %814 = vmatprep.subr.bf16.mxu0 0
  %815 = vmatpush1.bf16.msra.mxu0 %v410
  %816 = vmatprep.subr.bf16.mxu0 0
  %817 = vmatpush1.bf16.msra.mxu0 %v407
  %818 = vmatprep.subr.bf16.mxu0 0
  %819 = vmatpush1.bf16.msra.mxu0 %v404
  %820 = vmatprep.subr.bf16.mxu0 0
  %821 = vmatpush1.bf16.msra.mxu0 %v401
  %822 = vmatprep.subr.bf16.mxu0 0
  %823 = vmatpush2.bf16.msra.mxu0 0
  %824 = vmatprep.subr.bf16.mxu0 0
  %825 = vmatpush2.bf16.msra.mxu0 0
  %826 = vmatprep.subr.bf16.mxu0 0
  %827 = vmatpush2.bf16.msra.mxu0 0
  %828 = vmatprep.subr.bf16.mxu0 0
  %829 = vmatpush2.bf16.msra.mxu0 0
  %830 = vmatprep.subr.bf16.mxu0 0
  %831 = vmatpush2.bf16.msra.mxu0 0
  %832 = vmatprep.subr.bf16.mxu0 0
  %833 = vmatpush2.bf16.msra.mxu0 0
  %834 = vmatprep.subr.bf16.mxu0 0
  %835 = vmatpush2.bf16.msra.mxu0 0
  %836 = vmatprep.subr.bf16.mxu0 0
  %837 = vmatpush2.bf16.msra.mxu0 0
  %838 = vmatprep.mubr.bf16.mxu0 0
  %839 = vmatmul.mubr.bf16.gmra.mxu0 %v764
  %v840 = vpop.f32.mrf.mxu0
  %v841 = vadd.f32 0.0, %v840
  %v842 = vpop.f32.mrf.mxu0
  %v843 = vpop.f32.mrf.mxu0
  %v844 = vpop.f32.mrf.mxu0
  %845 = vdwg.mxu0
  %v846 = vadd.f32 %v761, %v800
  %v847 = vxor.u32 %v846, 2147483648
  %v848 = vmul.f32 %v847, 1.442695
  %v849 = vpow.pop %v848
  %v850 = vadd.f32 %v849, 1.0
  %v851 = vrcp.pop %v850
  %v852 = vmul.f32 1.0, %v851
  %v853 = vadd.f32 %v762, %v802
  %v854 = vxor.u32 %v853, 2147483648
  %v855 = vmul.f32 %v854, 1.442695
  %v856 = vpow.pop %v855
  %v857 = vadd.f32 %v856, 1.0
  %v858 = vrcp.pop %v857
  %v859 = vmul.f32 1.0, %v858
  %v860 = vadd.f32 %v841, %v282
  %v861 = vmul.f32 %v852, %v860
  %v862 = vadd.f32 %v763, %v861
  %v863 = vtanh.pop %v862
  %v864 = vsub.f32 %v760, %v863
  %v865 = vmul.f32 %v859, %v864
  %v866 = vadd.f32 %v863, %v865
  %v867 = vld [vmem:[#allocation2 + $0x60] sm:$0xff]
  %v868 = vld [vmem:[#allocation2 + $0x68] sm:$0xff]
  %v869 = vld [vmem:[#allocation2 + $0x70] sm:$0xff]
  %v870 = vpack.c.bf16 %v866, %v866
  %871 = vmatprep.subr.bf16.mxu0 %v421
  %872 = vmatpush1.bf16.msra.mxu0 %v420
  %873 = vmatprep.subr.bf16.mxu0 %v418
  %874 = vmatpush1.bf16.msra.mxu0 %v417
  %875 = vmatprep.subr.bf16.mxu0 %v415
  %876 = vmatpush1.bf16.msra.mxu0 %v414
  %877 = vmatprep.subr.bf16.mxu0 %v412
  %878 = vmatpush1.bf16.msra.mxu0 %v411
  %879 = vmatprep.subr.bf16.mxu0 %v409
  %880 = vmatpush1.bf16.msra.mxu0 %v408
  %881 = vmatprep.subr.bf16.mxu0 %v406
  %882 = vmatpush1.bf16.msra.mxu0 %v405
  %883 = vmatprep.subr.bf16.mxu0 %v403
  %884 = vmatpush1.bf16.msra.mxu0 %v402
  %885 = vmatprep.subr.bf16.mxu0 %v400
  %886 = vmatpush1.bf16.msra.mxu0 %v399
  %887 = vmatprep.subr.bf16.mxu0 0
  %888 = vmatpush2.bf16.msra.mxu0 0
  %889 = vmatprep.subr.bf16.mxu0 0
  %890 = vmatpush2.bf16.msra.mxu0 0
  %891 = vmatprep.subr.bf16.mxu0 0
  %892 = vmatpush2.bf16.msra.mxu0 0
  %893 = vmatprep.subr.bf16.mxu0 0
  %894 = vmatpush2.bf16.msra.mxu0 0
  %895 = vmatprep.subr.bf16.mxu0 0
  %896 = vmatpush2.bf16.msra.mxu0 0
  %897 = vmatprep.subr.bf16.mxu0 0
  %898 = vmatpush2.bf16.msra.mxu0 0
  %899 = vmatprep.subr.bf16.mxu0 0
  %900 = vmatpush2.bf16.msra.mxu0 0
  %901 = vmatprep.subr.bf16.mxu0 0
  %902 = vmatpush2.bf16.msra.mxu0 0
  %903 = vmatprep.mubr.bf16.mxu0 0
  %904 = vmatmul.mubr.bf16.gmra.mxu0 %v870
  %v905 = vpop.f32.mrf.mxu0
  %v906 = vadd.f32 0.0, %v905
  %v907 = vpop.f32.mrf.mxu0
  %v908 = vadd.f32 0.0, %v907
  %v909 = vpop.f32.mrf.mxu0
  %v910 = vpop.f32.mrf.mxu0
  %911 = vdwg.mxu0
  %912 = vmatprep.subr.bf16.mxu0 0
  %913 = vmatpush1.bf16.msra.mxu0 %v422
  %914 = vmatprep.subr.bf16.mxu0 0
  %915 = vmatpush1.bf16.msra.mxu0 %v419
  %916 = vmatprep.subr.bf16.mxu0 0
  %917 = vmatpush1.bf16.msra.mxu0 %v416
  %918 = vmatprep.subr.bf16.mxu0 0
  %919 = vmatpush1.bf16.msra.mxu0 %v413
  %920 = vmatprep.subr.bf16.mxu0 0
  %921 = vmatpush1.bf16.msra.mxu0 %v410
  %922 = vmatprep.subr.bf16.mxu0 0
  %923 = vmatpush1.bf16.msra.mxu0 %v407
  %924 = vmatprep.subr.bf16.mxu0 0
  %925 = vmatpush1.bf16.msra.mxu0 %v404
  %926 = vmatprep.subr.bf16.mxu0 0
  %927 = vmatpush1.bf16.msra.mxu0 %v401
  %928 = vmatprep.subr.bf16.mxu0 0
  %929 = vmatpush2.bf16.msra.mxu0 0
  %930 = vmatprep.subr.bf16.mxu0 0
  %931 = vmatpush2.bf16.msra.mxu0 0
  %932 = vmatprep.subr.bf16.mxu0 0
  %933 = vmatpush2.bf16.msra.mxu0 0
  %934 = vmatprep.subr.bf16.mxu0 0
  %935 = vmatpush2.bf16.msra.mxu0 0
  %936 = vmatprep.subr.bf16.mxu0 0
  %937 = vmatpush2.bf16.msra.mxu0 0
  %938 = vmatprep.subr.bf16.mxu0 0
  %939 = vmatpush2.bf16.msra.mxu0 0
  %940 = vmatprep.subr.bf16.mxu0 0
  %941 = vmatpush2.bf16.msra.mxu0 0
  %942 = vmatprep.subr.bf16.mxu0 0
  %943 = vmatpush2.bf16.msra.mxu0 0
  %944 = vmatprep.mubr.bf16.mxu0 0
  %945 = vmatmul.mubr.bf16.gmra.mxu0 %v870
  %v946 = vpop.f32.mrf.mxu0
  %v947 = vadd.f32 0.0, %v946
  %v948 = vpop.f32.mrf.mxu0
  %v949 = vpop.f32.mrf.mxu0
  %v950 = vpop.f32.mrf.mxu0
  %951 = vdwg.mxu0
  %v952 = vadd.f32 %v867, %v906
  %v953 = vxor.u32 %v952, 2147483648
  %v954 = vmul.f32 %v953, 1.442695
  %v955 = vpow.pop %v954
  %v956 = vadd.f32 %v955, 1.0
  %v957 = vrcp.pop %v956
  %v958 = vmul.f32 1.0, %v957
  %v959 = vadd.f32 %v868, %v908
  %v960 = vxor.u32 %v959, 2147483648
  %v961 = vmul.f32 %v960, 1.442695
  %v962 = vpow.pop %v961
  %v963 = vadd.f32 %v962, 1.0
  %v964 = vrcp.pop %v963
  %v965 = vmul.f32 1.0, %v964
  %v966 = vadd.f32 %v947, %v282
  %v967 = vmul.f32 %v958, %v966
  %v968 = vadd.f32 %v869, %v967
  %v969 = vtanh.pop %v968
  %v970 = vsub.f32 %v866, %v969
  %v971 = vmul.f32 %v965, %v970
  %v972 = vadd.f32 %v969, %v971
  %v973 = vld [vmem:[#allocation2 + $0x78] sm:$0xff]
  %v974 = vld [vmem:[#allocation2 + $0x80] sm:$0xff]
  %v975 = vld [vmem:[#allocation2 + $0x88] sm:$0xff]
  %v976 = vpack.c.bf16 %v972, %v972
  %977 = vmatprep.subr.bf16.mxu0 %v421
  %978 = vmatpush1.bf16.msra.mxu0 %v420
  %979 = vmatprep.subr.bf16.mxu0 %v418
  %980 = vmatpush1.bf16.msra.mxu0 %v417
  %981 = vmatprep.subr.bf16.mxu0 %v415
  %982 = vmatpush1.bf16.msra.mxu0 %v414
  %983 = vmatprep.subr.bf16.mxu0 %v412
  %984 = vmatpush1.bf16.msra.mxu0 %v411
  %985 = vmatprep.subr.bf16.mxu0 %v409
  %986 = vmatpush1.bf16.msra.mxu0 %v408
  %987 = vmatprep.subr.bf16.mxu0 %v406
  %988 = vmatpush1.bf16.msra.mxu0 %v405
  %989 = vmatprep.subr.bf16.mxu0 %v403
  %990 = vmatpush1.bf16.msra.mxu0 %v402
  %991 = vmatprep.subr.bf16.mxu0 %v400
  %992 = vmatpush1.bf16.msra.mxu0 %v399
  %993 = vmatprep.subr.bf16.mxu0 0
  %994 = vmatpush2.bf16.msra.mxu0 0
  %995 = vmatprep.subr.bf16.mxu0 0
  %996 = vmatpush2.bf16.msra.mxu0 0
  %997 = vmatprep.subr.bf16.mxu0 0
  %998 = vmatpush2.bf16.msra.mxu0 0
  %999 = vmatprep.subr.bf16.mxu0 0
  %1000 = vmatpush2.bf16.msra.mxu0 0
  %1001 = vmatprep.subr.bf16.mxu0 0
  %1002 = vmatpush2.bf16.msra.mxu0 0
  %1003 = vmatprep.subr.bf16.mxu0 0
  %1004 = vmatpush2.bf16.msra.mxu0 0
  %1005 = vmatprep.subr.bf16.mxu0 0
  %1006 = vmatpush2.bf16.msra.mxu0 0
  %1007 = vmatprep.subr.bf16.mxu0 0
  %1008 = vmatpush2.bf16.msra.mxu0 0
  %1009 = vmatprep.mubr.bf16.mxu0 0
  %1010 = vmatmul.mubr.bf16.gmra.mxu0 %v976
  %v1011 = vpop.f32.mrf.mxu0
  %v1012 = vadd.f32 0.0, %v1011
  %v1013 = vpop.f32.mrf.mxu0
  %v1014 = vadd.f32 0.0, %v1013
  %v1015 = vpop.f32.mrf.mxu0
  %v1016 = vpop.f32.mrf.mxu0
  %1017 = vdwg.mxu0
  %1018 = vmatprep.subr.bf16.mxu0 0
  %1019 = vmatpush1.bf16.msra.mxu0 %v422
  %1020 = vmatprep.subr.bf16.mxu0 0
  %1021 = vmatpush1.bf16.msra.mxu0 %v419
  %1022 = vmatprep.subr.bf16.mxu0 0
  %1023 = vmatpush1.bf16.msra.mxu0 %v416
  %1024 = vmatprep.subr.bf16.mxu0 0
  %1025 = vmatpush1.bf16.msra.mxu0 %v413
  %1026 = vmatprep.subr.bf16.mxu0 0
  %1027 = vmatpush1.bf16.msra.mxu0 %v410
  %1028 = vmatprep.subr.bf16.mxu0 0
  %1029 = vmatpush1.bf16.msra.mxu0 %v407
  %1030 = vmatprep.subr.bf16.mxu0 0
  %1031 = vmatpush1.bf16.msra.mxu0 %v404
  %1032 = vmatprep.subr.bf16.mxu0 0
  %1033 = vmatpush1.bf16.msra.mxu0 %v401
  %1034 = vmatprep.subr.bf16.mxu0 0
  %1035 = vmatpush2.bf16.msra.mxu0 0
  %1036 = vmatprep.subr.bf16.mxu0 0
  %1037 = vmatpush2.bf16.msra.mxu0 0
  %1038 = vmatprep.subr.bf16.mxu0 0
  %1039 = vmatpush2.bf16.msra.mxu0 0
  %1040 = vmatprep.subr.bf16.mxu0 0
  %1041 = vmatpush2.bf16.msra.mxu0 0
  %1042 = vmatprep.subr.bf16.mxu0 0
  %1043 = vmatpush2.bf16.msra.mxu0 0
  %1044 = vmatprep.subr.bf16.mxu0 0
  %1045 = vmatpush2.bf16.msra.mxu0 0
  %1046 = vmatprep.subr.bf16.mxu0 0
  %1047 = vmatpush2.bf16.msra.mxu0 0
  %1048 = vmatprep.subr.bf16.mxu0 0
  %1049 = vmatpush2.bf16.msra.mxu0 0
  %1050 = vmatprep.mubr.bf16.mxu0 0
  %1051 = vmatmul.mubr.bf16.gmra.mxu0 %v976
  %v1052 = vpop.f32.mrf.mxu0
  %v1053 = vadd.f32 0.0, %v1052
  %v1054 = vpop.f32.mrf.mxu0
  %v1055 = vpop.f32.mrf.mxu0
  %v1056 = vpop.f32.mrf.mxu0
  %1057 = vdwg.mxu0
  %v1058 = vadd.f32 %v973, %v1012
  %v1059 = vxor.u32 %v1058, 2147483648
  %v1060 = vmul.f32 %v1059, 1.442695
  %v1061 = vpow.pop %v1060
  %v1062 = vadd.f32 %v1061, 1.0
  %v1063 = vrcp.pop %v1062
  %v1064 = vmul.f32 1.0, %v1063
  %v1065 = vadd.f32 %v974, %v1014
  %v1066 = vxor.u32 %v1065, 2147483648
  %v1067 = vmul.f32 %v1066, 1.442695
  %v1068 = vpow.pop %v1067
  %v1069 = vadd.f32 %v1068, 1.0
  %v1070 = vrcp.pop %v1069
  %v1071 = vmul.f32 1.0, %v1070
  %v1072 = vadd.f32 %v1053, %v282
  %v1073 = vmul.f32 %v1064, %v1072
  %v1074 = vadd.f32 %v975, %v1073
  %v1075 = vtanh.pop %v1074
  %v1076 = vsub.f32 %v972, %v1075
  %v1077 = vmul.f32 %v1071, %v1076
  %v1078 = vadd.f32 %v1075, %v1077
  %v1079 = vld [vmem:[#allocation2 + $0x90] sm:$0xff]
  %v1080 = vld [vmem:[#allocation2 + $0x98] sm:$0xff]
  %v1081 = vld [vmem:[#allocation2 + $0xa0] sm:$0xff]
  %v1082 = vpack.c.bf16 %v1078, %v1078
  %1083 = vmatprep.subr.bf16.mxu0 %v421
  %1084 = vmatpush1.bf16.msra.mxu0 %v420
  %1085 = vmatprep.subr.bf16.mxu0 %v418
  %1086 = vmatpush1.bf16.msra.mxu0 %v417
  %1087 = vmatprep.subr.bf16.mxu0 %v415
  %1088 = vmatpush1.bf16.msra.mxu0 %v414
  %1089 = vmatprep.subr.bf16.mxu0 %v412
  %1090 = vmatpush1.bf16.msra.mxu0 %v411
  %1091 = vmatprep.subr.bf16.mxu0 %v409
  %1092 = vmatpush1.bf16.msra.mxu0 %v408
  %1093 = vmatprep.subr.bf16.mxu0 %v406
  %1094 = vmatpush1.bf16.msra.mxu0 %v405
  %1095 = vmatprep.subr.bf16.mxu0 %v403
  %1096 = vmatpush1.bf16.msra.mxu0 %v402
  %1097 = vmatprep.subr.bf16.mxu0 %v400
  %1098 = vmatpush1.bf16.msra.mxu0 %v399
  %1099 = vmatprep.subr.bf16.mxu0 0
  %1100 = vmatpush2.bf16.msra.mxu0 0
  %1101 = vmatprep.subr.bf16.mxu0 0
  %1102 = vmatpush2.bf16.msra.mxu0 0
  %1103 = vmatprep.subr.bf16.mxu0 0
  %1104 = vmatpush2.bf16.msra.mxu0 0
  %1105 = vmatprep.subr.bf16.mxu0 0
  %1106 = vmatpush2.bf16.msra.mxu0 0
  %1107 = vmatprep.subr.bf16.mxu0 0
  %1108 = vmatpush2.bf16.msra.mxu0 0
  %1109 = vmatprep.subr.bf16.mxu0 0
  %1110 = vmatpush2.bf16.msra.mxu0 0
  %1111 = vmatprep.subr.bf16.mxu0 0
  %1112 = vmatpush2.bf16.msra.mxu0 0
  %1113 = vmatprep.subr.bf16.mxu0 0
  %1114 = vmatpush2.bf16.msra.mxu0 0
  %1115 = vmatprep.mubr.bf16.mxu0 0
  %1116 = vmatmul.mubr.bf16.gmra.mxu0 %v1082
  %v1117 = vpop.f32.mrf.mxu0
  %v1118 = vadd.f32 0.0, %v1117
  %v1119 = vpop.f32.mrf.mxu0
  %v1120 = vadd.f32 0.0, %v1119
  %v1121 = vpop.f32.mrf.mxu0
  %v1122 = vpop.f32.mrf.mxu0
  %1123 = vdwg.mxu0
  %1124 = vmatprep.subr.bf16.mxu0 0
  %1125 = vmatpush1.bf16.msra.mxu0 %v422
  %1126 = vmatprep.subr.bf16.mxu0 0
  %1127 = vmatpush1.bf16.msra.mxu0 %v419
  %1128 = vmatprep.subr.bf16.mxu0 0
  %1129 = vmatpush1.bf16.msra.mxu0 %v416
  %1130 = vmatprep.subr.bf16.mxu0 0
  %1131 = vmatpush1.bf16.msra.mxu0 %v413
  %1132 = vmatprep.subr.bf16.mxu0 0
  %1133 = vmatpush1.bf16.msra.mxu0 %v410
  %1134 = vmatprep.subr.bf16.mxu0 0
  %1135 = vmatpush1.bf16.msra.mxu0 %v407
  %1136 = vmatprep.subr.bf16.mxu0 0
  %1137 = vmatpush1.bf16.msra.mxu0 %v404
  %1138 = vmatprep.subr.bf16.mxu0 0
  %1139 = vmatpush1.bf16.msra.mxu0 %v401
  %1140 = vmatprep.subr.bf16.mxu0 0
  %1141 = vmatpush2.bf16.msra.mxu0 0
  %1142 = vmatprep.subr.bf16.mxu0 0
  %1143 = vmatpush2.bf16.msra.mxu0 0
  %1144 = vmatprep.subr.bf16.mxu0 0
  %1145 = vmatpush2.bf16.msra.mxu0 0
  %1146 = vmatprep.subr.bf16.mxu0 0
  %1147 = vmatpush2.bf16.msra.mxu0 0
  %1148 = vmatprep.subr.bf16.mxu0 0
  %1149 = vmatpush2.bf16.msra.mxu0 0
  %1150 = vmatprep.subr.bf16.mxu0 0
  %1151 = vmatpush2.bf16.msra.mxu0 0
  %1152 = vmatprep.subr.bf16.mxu0 0
  %1153 = vmatpush2.bf16.msra.mxu0 0
  %1154 = vmatprep.subr.bf16.mxu0 0
  %1155 = vmatpush2.bf16.msra.mxu0 0
  %1156 = vmatprep.mubr.bf16.mxu0 0
  %1157 = vmatmul.mubr.bf16.gmra.mxu0 %v1082
  %v1158 = vpop.f32.mrf.mxu0
  %v1159 = vadd.f32 0.0, %v1158
  %v1160 = vpop.f32.mrf.mxu0
  %v1161 = vpop.f32.mrf.mxu0
  %v1162 = vpop.f32.mrf.mxu0
  %1163 = vdwg.mxu0
  %v1164 = vadd.f32 %v1079, %v1118
  %v1165 = vxor.u32 %v1164, 2147483648
  %v1166 = vmul.f32 %v1165, 1.442695
  %v1167 = vpow.pop %v1166
  %v1168 = vadd.f32 %v1167, 1.0
  %v1169 = vrcp.pop %v1168
  %v1170 = vmul.f32 1.0, %v1169
  %v1171 = vadd.f32 %v1080, %v1120
  %v1172 = vxor.u32 %v1171, 2147483648
  %v1173 = vmul.f32 %v1172, 1.442695
  %v1174 = vpow.pop %v1173
  %v1175 = vadd.f32 %v1174, 1.0
  %v1176 = vrcp.pop %v1175
  %v1177 = vmul.f32 1.0, %v1176
  %v1178 = vadd.f32 %v1159, %v282
  %v1179 = vmul.f32 %v1170, %v1178
  %v1180 = vadd.f32 %v1081, %v1179
  %v1181 = vtanh.pop %v1180
  %v1182 = vsub.f32 %v1078, %v1181
  %v1183 = vmul.f32 %v1177, %v1182
  %v1184 = vadd.f32 %v1181, %v1183
  %v1185 = vld [vmem:[#allocation2 + $0xa8] sm:$0xff]
  %v1186 = vld [vmem:[#allocation2 + $0xb0] sm:$0xff]
  %v1187 = vld [vmem:[#allocation2 + $0xb8] sm:$0xff]
  %v1188 = vpack.c.bf16 %v1184, %v1184
  %1189 = vmatprep.subr.bf16.mxu0 %v421
  %1190 = vmatpush1.bf16.msra.mxu0 %v420
  %1191 = vmatprep.subr.bf16.mxu0 %v418
  %1192 = vmatpush1.bf16.msra.mxu0 %v417
  %1193 = vmatprep.subr.bf16.mxu0 %v415
  %1194 = vmatpush1.bf16.msra.mxu0 %v414
  %1195 = vmatprep.subr.bf16.mxu0 %v412
  %1196 = vmatpush1.bf16.msra.mxu0 %v411
  %1197 = vmatprep.subr.bf16.mxu0 %v409
  %1198 = vmatpush1.bf16.msra.mxu0 %v408
  %1199 = vmatprep.subr.bf16.mxu0 %v406
  %1200 = vmatpush1.bf16.msra.mxu0 %v405
  %1201 = vmatprep.subr.bf16.mxu0 %v403
  %1202 = vmatpush1.bf16.msra.mxu0 %v402
  %1203 = vmatprep.subr.bf16.mxu0 %v400
  %1204 = vmatpush1.bf16.msra.mxu0 %v399
  %1205 = vmatprep.subr.bf16.mxu0 0
  %1206 = vmatpush2.bf16.msra.mxu0 0
  %1207 = vmatprep.subr.bf16.mxu0 0
  %1208 = vmatpush2.bf16.msra.mxu0 0
  %1209 = vmatprep.subr.bf16.mxu0 0
  %1210 = vmatpush2.bf16.msra.mxu0 0
  %1211 = vmatprep.subr.bf16.mxu0 0
  %1212 = vmatpush2.bf16.msra.mxu0 0
  %1213 = vmatprep.subr.bf16.mxu0 0
  %1214 = vmatpush2.bf16.msra.mxu0 0
  %1215 = vmatprep.subr.bf16.mxu0 0
  %1216 = vmatpush2.bf16.msra.mxu0 0
  %1217 = vmatprep.subr.bf16.mxu0 0
  %1218 = vmatpush2.bf16.msra.mxu0 0
  %1219 = vmatprep.subr.bf16.mxu0 0
  %1220 = vmatpush2.bf16.msra.mxu0 0
  %1221 = vmatprep.mubr.bf16.mxu0 0
  %1222 = vmatmul.mubr.bf16.gmra.mxu0 %v1188
  %v1223 = vpop.f32.mrf.mxu0
  %v1224 = vadd.f32 0.0, %v1223
  %v1225 = vpop.f32.mrf.mxu0
  %v1226 = vadd.f32 0.0, %v1225
  %v1227 = vpop.f32.mrf.mxu0
  %v1228 = vpop.f32.mrf.mxu0
  %1229 = vdwg.mxu0
  %1230 = vmatprep.subr.bf16.mxu0 0
  %1231 = vmatpush1.bf16.msra.mxu0 %v422
  %1232 = vmatprep.subr.bf16.mxu0 0
  %1233 = vmatpush1.bf16.msra.mxu0 %v419
  %1234 = vmatprep.subr.bf16.mxu0 0
  %1235 = vmatpush1.bf16.msra.mxu0 %v416
  %1236 = vmatprep.subr.bf16.mxu0 0
  %1237 = vmatpush1.bf16.msra.mxu0 %v413
  %1238 = vmatprep.subr.bf16.mxu0 0
  %1239 = vmatpush1.bf16.msra.mxu0 %v410
  %1240 = vmatprep.subr.bf16.mxu0 0
  %1241 = vmatpush1.bf16.msra.mxu0 %v407
  %1242 = vmatprep.subr.bf16.mxu0 0
  %1243 = vmatpush1.bf16.msra.mxu0 %v404
  %1244 = vmatprep.subr.bf16.mxu0 0
  %1245 = vmatpush1.bf16.msra.mxu0 %v401
  %1246 = vmatprep.subr.bf16.mxu0 0
  %1247 = vmatpush2.bf16.msra.mxu0 0
  %1248 = vmatprep.subr.bf16.mxu0 0
  %1249 = vmatpush2.bf16.msra.mxu0 0
  %1250 = vmatprep.subr.bf16.mxu0 0
  %1251 = vmatpush2.bf16.msra.mxu0 0
  %1252 = vmatprep.subr.bf16.mxu0 0
  %1253 = vmatpush2.bf16.msra.mxu0 0
  %1254 = vmatprep.subr.bf16.mxu0 0
  %1255 = vmatpush2.bf16.msra.mxu0 0
  %1256 = vmatprep.subr.bf16.mxu0 0
  %1257 = vmatpush2.bf16.msra.mxu0 0
  %1258 = vmatprep.subr.bf16.mxu0 0
  %1259 = vmatpush2.bf16.msra.mxu0 0
  %1260 = vmatprep.subr.bf16.mxu0 0
  %1261 = vmatpush2.bf16.msra.mxu0 0
  %1262 = vmatprep.mubr.bf16.mxu0 0
  %1263 = vmatmul.mubr.bf16.gmra.mxu0 %v1188
  %v1264 = vpop.f32.mrf.mxu0
  %v1265 = vadd.f32 0.0, %v1264
  %v1266 = vpop.f32.mrf.mxu0
  %v1267 = vpop.f32.mrf.mxu0
  %v1268 = vpop.f32.mrf.mxu0
  %1269 = vdwg.mxu0
  %v1270 = vadd.f32 %v1185, %v1224
  %v1271 = vxor.u32 %v1270, 2147483648
  %v1272 = vmul.f32 %v1271, 1.442695
  %v1273 = vpow.pop %v1272
  %v1274 = vadd.f32 %v1273, 1.0
  %v1275 = vrcp.pop %v1274
  %v1276 = vmul.f32 1.0, %v1275
  %v1277 = vadd.f32 %v1186, %v1226
  %v1278 = vxor.u32 %v1277, 2147483648
  %v1279 = vmul.f32 %v1278, 1.442695
  %v1280 = vpow.pop %v1279
  %v1281 = vadd.f32 %v1280, 1.0
  %v1282 = vrcp.pop %v1281
  %v1283 = vmul.f32 1.0, %v1282
  %v1284 = vadd.f32 %v1265, %v282
  %v1285 = vmul.f32 %v1276, %v1284
  %v1286 = vadd.f32 %v1187, %v1285
  %v1287 = vtanh.pop %v1286
  %v1288 = vsub.f32 %v1184, %v1287
  %v1289 = vmul.f32 %v1283, %v1288
  %v1290 = vadd.f32 %v1287, %v1289
  %v1291 = vld [vmem:[%s5] sm:$0x1]
  %v1293 = vlaneseq
  %v1294 = vshrl.u32 %v1293, 7
  %v1295 = vsub.s32 0, %v1294
  %v1296 = vrot.slane %v1291, %v1295
  %v1298 = vmul.f32 %v1290, %v1296
  %1299 = vadd.xlane.f32.xlu0 %v1298
  %v1300 = vpop.xlane.xlu0 %1299
  %v1301 = vld [vmem:[#allocation3] sm:$0x1]
  %v1303 = vlaneseq
  %v1304 = vshrl.u32 %v1303, 7
  %v1305 = vsub.s32 0, %v1304
  %v1306 = vrot.slane %v1301, %v1305
  %v1308 = vadd.f32 %v1300, %v1306
  %vm1309 = vcmask 7168
  %1310 = vst.msk [vmem:[%s7] sm:$0xff] %vm1309, %v1308
  // Predicated region
  $region30: #{gru_model_forward.1} parent=0 // pred_check
    _
  $region31: #{gru_model_forward.1} parent=0 // pred_check_branch
    %1312 = sbr.rel (0) target = $region33
  $region32: #{gru_model_forward.1} parent=0 // pred_region
    _
  $region33: #{gru_model_forward.1} parent=0 // pred_fallthru
    _
  // Predicated region
  $region34: #{gru_model_forward.1} parent=0 // pred_check
    _
  $region35: #{gru_model_forward.1} parent=0 // pred_check_branch
    %1314 = sbr.rel (0) target = $region37
  $region36: #{gru_model_forward.1} parent=0 // pred_region
    _
  $region37: #{gru_model_forward.1} parent=0 // pred_fallthru
    _

</llo_original>
